<compile_context>
chip_gen: v7x
topology: tpu7x:2x2x1
jax: 0.10.0
libtpu: 0.0.40
codegen_flags: <defaults>
</compile_context>

<pallas_src>
import jax
import jax.numpy as jnp
from jax.experimental import pallas as pl
from jax.experimental.pallas import tpu as pltpu

NEG_SLOPE = 0.01  # nn.LeakyReLU default negative_slope


# ----------------------------------------------------------------------------
# Fused kernel
# ----------------------------------------------------------------------------
def _make_fused_kernel(num_block, has_skip, Wq, S):
    def leaky(v):
        return jnp.where(v >= 0, v, v * NEG_SLOPE)

    def kernel(*refs):
        p1_ref, xs_ref, mask_ref, w1_ref, b1_ref, w2_ref, b2_ref = refs[:7]
        idx = 7
        if has_skip:
            ws_ref, bs_ref = refs[idx:idx + 2]
            idx += 2
        blocks = []
        for _ in range(num_block):
            blocks.append(refs[idx:idx + 6])   # wa, ba, wb, bb, wc, bc
            idx += 6
        o_ref = refs[idx]

        mask = mask_ref[...]                   # (1, S): 1.0 on interior pixels

        def mm(w_ref, b_ref, rhs):             # (Cp, K) @ (K, S) + bias
            return jnp.dot(w_ref[...], rhs,
                           preferred_element_type=jnp.float32) + b_ref[...]

        def patches3x3(x):                     # (Cp, S) -> (9*Cp, S) im2col
            cols = []
            for dy in (-1, 0, 1):
                for dx in (-1, 0, 1):
                    off = dy * Wq + dx         # flat lane offset of this tap
                    if off == 0:
                        cols.append(x)
                    else:
                        # want out[p] = x[p + off]; roll wrap only ever lands
                        # on border/dead positions which are masked to zero.
                        cols.append(pltpu.roll(x, (-off) % S, axis=1))
            return jnp.concatenate(cols, axis=0)

        # ---- BasicBlock: act(skip(x) + conv2(act(conv1(x)))) ----
        y1 = leaky(mm(w1_ref, b1_ref, p1_ref[...])) * mask
        if has_skip:
            skip = mm(ws_ref, bs_ref, xs_ref[...])    # 1x1 conv, no activation
        else:
            skip = xs_ref[...]                        # identity skip
        y = leaky(mm(w2_ref, b2_ref, patches3x3(y1)) + skip) * mask

        # ---- num_block x BottleNeck: act(y + 1x1 -> 3x3 -> 1x1) ----
        for (wa_ref, ba_ref, wb_ref, bb_ref, wc_ref, bc_ref) in blocks:
            t = leaky(mm(wa_ref, ba_ref, y)) * mask
            t = leaky(mm(wb_ref, bb_ref, patches3x3(t))) * mask
            y = leaky(mm(wc_ref, bc_ref, t) + y) * mask

        o_ref[...] = y.astype(o_ref.dtype)

    return kernel


# ----------------------------------------------------------------------------
# Wrapper-side packing helpers (plain XLA, run once per forward)
# ----------------------------------------------------------------------------
def _round_up(v, m):
    return ((v + m - 1) // m) * m


def _pack_w3(w, cp):
    """(3,3,cin,cout) HWIO -> (cp, 9*cp); col index = (ky*3+kx)*cp + cin."""
    kh, kw, cin, cout = w.shape
    wp = jnp.zeros((kh, kw, cp, cp), w.dtype).at[:, :, :cin, :cout].set(w)
    return jnp.transpose(wp, (3, 0, 1, 2)).reshape(cp, kh * kw * cp)


def _pack_w1(w, cp):
    """(1,1,cin,cout) HWIO -> (cp, cp) with rows=cout, cols=cin."""
    m = w[0, 0].T                                             # (cout, cin)
    return jnp.zeros((cp, cp), w.dtype).at[:m.shape[0], :m.shape[1]].set(m)


def _pack_b(b, cp):
    return jnp.zeros((cp, 1), b.dtype).at[:b.shape[0], 0].set(b)


def _embed(a, Hq, Wq):
    """(C, N, Ho, Wo) -> (C, N*Hq*Wq), interior placed at [1:1+Ho, 1:1+Wo]."""
    C, N, Ho, Wo = a.shape
    buf = jnp.zeros((C, N, Hq, Wq), a.dtype).at[:, :, 1:1 + Ho, 1:1 + Wo].set(a)
    return buf.reshape(C, N * Hq * Wq)


# ----------------------------------------------------------------------------
# Parameter init (deterministic, synthetic), weights stored HWIO
# ----------------------------------------------------------------------------
def _init_conv(key, kh, kw, cin, cout):
    kw_, kb_ = jax.random.split(key)
    fan_in = kh * kw * cin
    w = jax.random.normal(kw_, (kh, kw, cin, cout), jnp.float32) / jnp.sqrt(fan_in)
    b = 0.01 * jax.random.normal(kb_, (cout,), jnp.float32)
    return w, b


def init_residual(key, inp_dim, out_dim, stride=2, num_block=2, reduction=2):
    keys = jax.random.split(key, 3 + 3 * num_block)
    params = {}
    # BasicBlock (reference declares the 2nd RepConv with inp_dim inputs, so
    # inp_dim must equal out_dim for the torch module to be runnable too).
    params["bb_conv1"] = _init_conv(keys[0], 3, 3, inp_dim, out_dim)
    params["bb_conv2"] = _init_conv(keys[1], 3, 3, inp_dim, out_dim)
    if stride == 2 or inp_dim != out_dim:
        params["bb_skip"] = _init_conv(keys[2], 1, 1, inp_dim, out_dim)
    mid = out_dim // reduction
    for i in range(num_block):
        params[f"bn{i}_1"] = _init_conv(keys[3 + 3 * i + 0], 1, 1, out_dim, mid)
        params[f"bn{i}_2"] = _init_conv(keys[3 + 3 * i + 1], 3, 3, mid, mid)
        params[f"bn{i}_3"] = _init_conv(keys[3 + 3 * i + 2], 1, 1, mid, out_dim)
    return params


# ----------------------------------------------------------------------------
# Forward pass: single fused pallas_call
# ----------------------------------------------------------------------------
def residual_forward(params, x, *, stride=2, num_block=2):
    """x: (N, Cin, H, W) NCHW float32. Returns (N, Cout, Ho, Wo) NCHW."""
    N, Cin, H, W = x.shape
    w1, b1 = params["bb_conv1"]
    Cout = w1.shape[-1]
    has_skip = "bb_skip" in params
    Ho = (H + 2 - 3) // stride + 1
    Wo = (W + 2 - 3) // stride + 1
    cp = _round_up(max(Cin, Cout), 8)          # padded channel width (sublanes)

    # Per-image padded grid (Hq, Wq): real padded (Ho+2, Wo+2) in the top-left,
    # extra rows/cols of zeros so that S = N*Hq*Wq is a multiple of 128.
    Wq = _round_up(Wo + 2, 8)
    Hq = Ho + 2
    for extra in range(129):
        if (N * (Hq + extra) * Wq) % 128 == 0:
            Hq = Hq + extra
            break
    S = N * Hq * Wq

    # ---- wrapper-side preamble (single small XLA chain on the input) ----
    xc = jnp.transpose(x, (1, 0, 2, 3))                          # (Cin,N,H,W)
    xc = jnp.zeros((cp, N, H, W), x.dtype).at[:Cin].set(xc)      # channel pad
    xpad = jnp.pad(xc, ((0, 0), (0, 0), (1, 1), (1, 1)))

    # im2col patches for the stride-s first 3x3 conv, laid out in the output
    # padded-flat layout (tap-major, channel-minor -> matches _pack_w3).
    taps = []
    for ky in range(3):
        for kx in range(3):
            taps.append(xpad[:, :, ky:ky + stride * (Ho - 1) + 1:stride,
                                   kx:kx + stride * (Wo - 1) + 1:stride])
    p1 = _embed(jnp.concatenate(taps, axis=0), Hq, Wq)           # (9*cp, S)

    if has_skip:
        xsub = xc[:, :, ::stride, ::stride]                      # 1x1 stride-s
    else:
        xsub = xc                                                # identity
    xs = _embed(xsub, Hq, Wq)                                    # (cp, S)

    mask = _embed(jnp.ones((1, N, Ho, Wo), jnp.float32), Hq, Wq)  # (1, S)

    # ---- packed weights / biases (channel-padded to cp) ----
    args = [p1, xs, mask, _pack_w3(w1, cp), _pack_b(b1, cp)]
    w2, b2 = params["bb_conv2"]
    args += [_pack_w3(w2, cp), _pack_b(b2, cp)]
    if has_skip:
        ws, bs = params["bb_skip"]
        args += [_pack_w1(ws, cp), _pack_b(bs, cp)]
    for i in range(num_block):
        wa, ba = params[f"bn{i}_1"]
        wb_, bb_ = params[f"bn{i}_2"]
        wc, bc = params[f"bn{i}_3"]
        args += [_pack_w1(wa, cp), _pack_b(ba, cp),
                 _pack_w3(wb_, cp), _pack_b(bb_, cp),
                 _pack_w1(wc, cp), _pack_b(bc, cp)]

    kernel = _make_fused_kernel(num_block, has_skip, Wq, S)
    out_flat = pl.pallas_call(
        kernel,
        out_shape=jax.ShapeDtypeStruct((cp, S), x.dtype),
        grid=(1,),
        in_specs=[pl.BlockSpec(a.shape, lambda i: (0, 0)) for a in args],
        out_specs=pl.BlockSpec((cp, S), lambda i: (0, 0)),
        compiler_params=pltpu.CompilerParams(
            dimension_semantics=("arbitrary",)),
    )(*args)

    out = out_flat.reshape(cp, N, Hq, Wq)[:Cout, :, 1:1 + Ho, 1:1 + Wo]
    return jnp.transpose(out, (1, 0, 2, 3))                      # NCHW


# ----------------------------------------------------------------------------
# Pure-JAX reference (XLA conv, NCHW) for correctness check
# ----------------------------------------------------------------------------
def _conv_ref(x, w, b, stride, pad):
    out = jax.lax.conv_general_dilated(
        x, w, (stride, stride), [(pad, pad), (pad, pad)],
        dimension_numbers=("NCHW", "HWIO", "NCHW"))
    return out + b.reshape(1, -1, 1, 1)


def residual_forward_ref(params, x, *, stride=2, num_block=2):
    act = lambda v: jnp.where(v >= 0, v, v * NEG_SLOPE)
    w1, b1 = params["bb_conv1"]
    y = act(_conv_ref(x, w1, b1, stride, 1))
    if "bb_skip" in params:
        ws, bs = params["bb_skip"]
        skip = _conv_ref(x, ws, bs, stride, 0)
    else:
        skip = x
    w2, b2 = params["bb_conv2"]
    y = act(skip + _conv_ref(y, w2, b2, 1, 1))
    for i in range(num_block):
        wa, ba = params[f"bn{i}_1"]
        wb, bb = params[f"bn{i}_2"]
        wc, bc = params[f"bn{i}_3"]
        t = act(_conv_ref(y, wa, ba, 1, 0))
        t = act(_conv_ref(t, wb, bb, 1, 1))
        y = act(y + _conv_ref(t, wc, bc, 1, 0))
    return y


if __name__ == "__main__":
    key = jax.random.PRNGKey(0)
    kx, kp = jax.random.split(key)

    # Small shapes consistent with the module: N=2, C=8, H=W=16 (NCHW as torch)
    N, C, H, W = 2, 8, 16, 16
    x = jax.random.normal(kx, (N, C, H, W), jnp.float32)

    params = init_residual(kp, inp_dim=C, out_dim=C, stride=2,
                           num_block=2, reduction=2)

    out = residual_forward(params, x, stride=2, num_block=2)
    out = jax.block_until_ready(out)

    ref = residual_forward_ref(params, x, stride=2, num_block=2)
    assert out.shape == (N, C, H // 2, W // 2), out.shape
    assert jnp.allclose(out, ref, atol=1e-3, rtol=1e-3), \
        float(jnp.max(jnp.abs(out - ref)))

    print("KERNEL_OK")
</pallas_src>

<mosaic_0001>
module attributes {stable_mosaic.version = 11 : i64} {
  func.func @kernel(%arg0: i32, %arg1: memref<72x384xf32, #tpu.memory_space<vmem>>, %arg2: memref<8x384xf32, #tpu.memory_space<vmem>>, %arg3: memref<1x384xf32, #tpu.memory_space<vmem>>, %arg4: memref<8x72xf32, #tpu.memory_space<vmem>>, %arg5: memref<8x1xf32, #tpu.memory_space<vmem>>, %arg6: memref<8x72xf32, #tpu.memory_space<vmem>>, %arg7: memref<8x1xf32, #tpu.memory_space<vmem>>, %arg8: memref<8x8xf32, #tpu.memory_space<vmem>>, %arg9: memref<8x1xf32, #tpu.memory_space<vmem>>, %arg10: memref<8x8xf32, #tpu.memory_space<vmem>>, %arg11: memref<8x1xf32, #tpu.memory_space<vmem>>, %arg12: memref<8x72xf32, #tpu.memory_space<vmem>>, %arg13: memref<8x1xf32, #tpu.memory_space<vmem>>, %arg14: memref<8x8xf32, #tpu.memory_space<vmem>>, %arg15: memref<8x1xf32, #tpu.memory_space<vmem>>, %arg16: memref<8x8xf32, #tpu.memory_space<vmem>>, %arg17: memref<8x1xf32, #tpu.memory_space<vmem>>, %arg18: memref<8x72xf32, #tpu.memory_space<vmem>>, %arg19: memref<8x1xf32, #tpu.memory_space<vmem>>, %arg20: memref<8x8xf32, #tpu.memory_space<vmem>>, %arg21: memref<8x1xf32, #tpu.memory_space<vmem>>, %arg22: memref<8x384xf32, #tpu.memory_space<vmem>>) attributes {dimension_semantics = [#tpu.dimension_semantics<arbitrary>], iteration_bounds = array<i64: 1>, scalar_prefetch = 0 : i64, scratch_operands = 0 : i64, tpu.core_type = #tpu.core_type<tc>, window_params = [{pipeline_mode = #tpu.pipeline_mode<synchronous>, transform_indices = @transform_0, window_bounds = array<i64: 72, 384>}, {pipeline_mode = #tpu.pipeline_mode<synchronous>, transform_indices = @transform_1, window_bounds = array<i64: 8, 384>}, {pipeline_mode = #tpu.pipeline_mode<synchronous>, transform_indices = @transform_2, window_bounds = array<i64: 1, 384>}, {pipeline_mode = #tpu.pipeline_mode<synchronous>, transform_indices = @transform_3, window_bounds = array<i64: 8, 72>}, {pipeline_mode = #tpu.pipeline_mode<synchronous>, transform_indices = @transform_4, window_bounds = array<i64: 8, 1>}, {pipeline_mode = #tpu.pipeline_mode<synchronous>, transform_indices = @transform_5, window_bounds = array<i64: 8, 72>}, {pipeline_mode = #tpu.pipeline_mode<synchronous>, transform_indices = @transform_6, window_bounds = array<i64: 8, 1>}, {pipeline_mode = #tpu.pipeline_mode<synchronous>, transform_indices = @transform_7, window_bounds = array<i64: 8, 8>}, {pipeline_mode = #tpu.pipeline_mode<synchronous>, transform_indices = @transform_8, window_bounds = array<i64: 8, 1>}, {pipeline_mode = #tpu.pipeline_mode<synchronous>, transform_indices = @transform_9, window_bounds = array<i64: 8, 8>}, {pipeline_mode = #tpu.pipeline_mode<synchronous>, transform_indices = @transform_10, window_bounds = array<i64: 8, 1>}, {pipeline_mode = #tpu.pipeline_mode<synchronous>, transform_indices = @transform_11, window_bounds = array<i64: 8, 72>}, {pipeline_mode = #tpu.pipeline_mode<synchronous>, transform_indices = @transform_12, window_bounds = array<i64: 8, 1>}, {pipeline_mode = #tpu.pipeline_mode<synchronous>, transform_indices = @transform_13, window_bounds = array<i64: 8, 8>}, {pipeline_mode = #tpu.pipeline_mode<synchronous>, transform_indices = @transform_14, window_bounds = array<i64: 8, 1>}, {pipeline_mode = #tpu.pipeline_mode<synchronous>, transform_indices = @transform_15, window_bounds = array<i64: 8, 8>}, {pipeline_mode = #tpu.pipeline_mode<synchronous>, transform_indices = @transform_16, window_bounds = array<i64: 8, 1>}, {pipeline_mode = #tpu.pipeline_mode<synchronous>, transform_indices = @transform_17, window_bounds = array<i64: 8, 72>}, {pipeline_mode = #tpu.pipeline_mode<synchronous>, transform_indices = @transform_18, window_bounds = array<i64: 8, 1>}, {pipeline_mode = #tpu.pipeline_mode<synchronous>, transform_indices = @transform_19, window_bounds = array<i64: 8, 8>}, {pipeline_mode = #tpu.pipeline_mode<synchronous>, transform_indices = @transform_20, window_bounds = array<i64: 8, 1>}, {pipeline_mode = #tpu.pipeline_mode<synchronous>, transform_indices = @transform_21, window_bounds = array<i64: 8, 384>}]} {
    %c0 = arith.constant 0 : index
    %c0_0 = arith.constant 0 : index
    %0 = vector.load %arg3[%c0, %c0_0] : memref<1x384xf32, #tpu.memory_space<vmem>>, vector<1x384xf32>
    %c0_1 = arith.constant 0 : index
    %c0_2 = arith.constant 0 : index
    %1 = vector.load %arg1[%c0_1, %c0_2] : memref<72x384xf32, #tpu.memory_space<vmem>>, vector<72x384xf32>
    %c0_3 = arith.constant 0 : index
    %c0_4 = arith.constant 0 : index
    %2 = vector.load %arg4[%c0_3, %c0_4] : memref<8x72xf32, #tpu.memory_space<vmem>>, vector<8x72xf32>
    %cst = arith.constant dense<0.000000e+00> : vector<8x384xf32>
    %3 = tpu.matmul %2, %1, %cst {dimension_numbers = #tpu.dot_dimension_numbers<[1], [0], [0], [1], [0, 0, 1, 1], [], []>} : vector<8x72xf32>, vector<72x384xf32>, vector<8x384xf32> -> vector<8x384xf32>
    %c0_5 = arith.constant 0 : index
    %c0_6 = arith.constant 0 : index
    %4 = vector.load %arg5[%c0_5, %c0_6] : memref<8x1xf32, #tpu.memory_space<vmem>>, vector<8x1xf32>
    %5 = vector.broadcast %4 : vector<8x1xf32> to vector<8x384xf32>
    %6 = arith.addf %3, %5 : vector<8x384xf32>
    %cst_7 = arith.constant 0.000000e+00 : f32
    %7 = vector.broadcast %cst_7 : f32 to vector<8x384xf32>
    %8 = arith.cmpf oge, %6, %7 : vector<8x384xf32>
    %cst_8 = arith.constant 0.00999999977 : f32
    %9 = vector.broadcast %cst_8 : f32 to vector<8x384xf32>
    %10 = arith.mulf %6, %9 : vector<8x384xf32>
    %11 = arith.select %8, %6, %10 : vector<8x384xi1>, vector<8x384xf32>
    %12 = vector.broadcast %0 : vector<1x384xf32> to vector<8x384xf32>
    %13 = arith.mulf %11, %12 : vector<8x384xf32>
    %c0_9 = arith.constant 0 : index
    %c0_10 = arith.constant 0 : index
    %14 = vector.load %arg2[%c0_9, %c0_10] : memref<8x384xf32, #tpu.memory_space<vmem>>, vector<8x384xf32>
    %c0_11 = arith.constant 0 : index
    %c0_12 = arith.constant 0 : index
    %15 = vector.load %arg8[%c0_11, %c0_12] : memref<8x8xf32, #tpu.memory_space<vmem>>, vector<8x8xf32>
    %cst_13 = arith.constant dense<0.000000e+00> : vector<8x384xf32>
    %16 = tpu.matmul %15, %14, %cst_13 {dimension_numbers = #tpu.dot_dimension_numbers<[1], [0], [0], [1], [0, 0, 1, 1], [], []>} : vector<8x8xf32>, vector<8x384xf32>, vector<8x384xf32> -> vector<8x384xf32>
    %c0_14 = arith.constant 0 : index
    %c0_15 = arith.constant 0 : index
    %17 = vector.load %arg9[%c0_14, %c0_15] : memref<8x1xf32, #tpu.memory_space<vmem>>, vector<8x1xf32>
    %18 = vector.broadcast %17 : vector<8x1xf32> to vector<8x384xf32>
    %19 = arith.addf %16, %18 : vector<8x384xf32>
    %c17_i32 = arith.constant 17 : i32
    %20 = tpu.dynamic_rotate %13 by %c17_i32 dim 1 : vector<8x384xf32>, i32 -> vector<8x384xf32>
    %c16_i32 = arith.constant 16 : i32
    %21 = tpu.dynamic_rotate %13 by %c16_i32 dim 1 : vector<8x384xf32>, i32 -> vector<8x384xf32>
    %c15_i32 = arith.constant 15 : i32
    %22 = tpu.dynamic_rotate %13 by %c15_i32 dim 1 : vector<8x384xf32>, i32 -> vector<8x384xf32>
    %c1_i32 = arith.constant 1 : i32
    %23 = tpu.dynamic_rotate %13 by %c1_i32 dim 1 : vector<8x384xf32>, i32 -> vector<8x384xf32>
    %c383_i32 = arith.constant 383 : i32
    %24 = tpu.dynamic_rotate %13 by %c383_i32 dim 1 : vector<8x384xf32>, i32 -> vector<8x384xf32>
    %c369_i32 = arith.constant 369 : i32
    %25 = tpu.dynamic_rotate %13 by %c369_i32 dim 1 : vector<8x384xf32>, i32 -> vector<8x384xf32>
    %c368_i32 = arith.constant 368 : i32
    %26 = tpu.dynamic_rotate %13 by %c368_i32 dim 1 : vector<8x384xf32>, i32 -> vector<8x384xf32>
    %c367_i32 = arith.constant 367 : i32
    %27 = tpu.dynamic_rotate %13 by %c367_i32 dim 1 : vector<8x384xf32>, i32 -> vector<8x384xf32>
    %28 = tpu.concatenate %20, %21, %22, %23, %13, %24, %25, %26, %27 in 0 : vector<8x384xf32>, vector<8x384xf32>, vector<8x384xf32>, vector<8x384xf32>, vector<8x384xf32>, vector<8x384xf32>, vector<8x384xf32>, vector<8x384xf32>, vector<8x384xf32> -> vector<72x384xf32>
    %c0_16 = arith.constant 0 : index
    %c0_17 = arith.constant 0 : index
    %29 = vector.load %arg6[%c0_16, %c0_17] : memref<8x72xf32, #tpu.memory_space<vmem>>, vector<8x72xf32>
    %cst_18 = arith.constant dense<0.000000e+00> : vector<8x384xf32>
    %30 = tpu.matmul %29, %28, %cst_18 {dimension_numbers = #tpu.dot_dimension_numbers<[1], [0], [0], [1], [0, 0, 1, 1], [], []>} : vector<8x72xf32>, vector<72x384xf32>, vector<8x384xf32> -> vector<8x384xf32>
    %c0_19 = arith.constant 0 : index
    %c0_20 = arith.constant 0 : index
    %31 = vector.load %arg7[%c0_19, %c0_20] : memref<8x1xf32, #tpu.memory_space<vmem>>, vector<8x1xf32>
    %32 = vector.broadcast %31 : vector<8x1xf32> to vector<8x384xf32>
    %33 = arith.addf %30, %32 : vector<8x384xf32>
    %34 = arith.addf %33, %19 : vector<8x384xf32>
    %cst_21 = arith.constant 0.000000e+00 : f32
    %35 = vector.broadcast %cst_21 : f32 to vector<8x384xf32>
    %36 = arith.cmpf oge, %34, %35 : vector<8x384xf32>
    %cst_22 = arith.constant 0.00999999977 : f32
    %37 = vector.broadcast %cst_22 : f32 to vector<8x384xf32>
    %38 = arith.mulf %34, %37 : vector<8x384xf32>
    %39 = arith.select %36, %34, %38 : vector<8x384xi1>, vector<8x384xf32>
    %40 = vector.broadcast %0 : vector<1x384xf32> to vector<8x384xf32>
    %41 = arith.mulf %39, %40 : vector<8x384xf32>
    %c0_23 = arith.constant 0 : index
    %c0_24 = arith.constant 0 : index
    %42 = vector.load %arg10[%c0_23, %c0_24] : memref<8x8xf32, #tpu.memory_space<vmem>>, vector<8x8xf32>
    %cst_25 = arith.constant dense<0.000000e+00> : vector<8x384xf32>
    %43 = tpu.matmul %42, %41, %cst_25 {dimension_numbers = #tpu.dot_dimension_numbers<[1], [0], [0], [1], [0, 0, 1, 1], [], []>} : vector<8x8xf32>, vector<8x384xf32>, vector<8x384xf32> -> vector<8x384xf32>
    %c0_26 = arith.constant 0 : index
    %c0_27 = arith.constant 0 : index
    %44 = vector.load %arg11[%c0_26, %c0_27] : memref<8x1xf32, #tpu.memory_space<vmem>>, vector<8x1xf32>
    %45 = vector.broadcast %44 : vector<8x1xf32> to vector<8x384xf32>
    %46 = arith.addf %43, %45 : vector<8x384xf32>
    %cst_28 = arith.constant 0.000000e+00 : f32
    %47 = vector.broadcast %cst_28 : f32 to vector<8x384xf32>
    %48 = arith.cmpf oge, %46, %47 : vector<8x384xf32>
    %cst_29 = arith.constant 0.00999999977 : f32
    %49 = vector.broadcast %cst_29 : f32 to vector<8x384xf32>
    %50 = arith.mulf %46, %49 : vector<8x384xf32>
    %51 = arith.select %48, %46, %50 : vector<8x384xi1>, vector<8x384xf32>
    %52 = vector.broadcast %0 : vector<1x384xf32> to vector<8x384xf32>
    %53 = arith.mulf %51, %52 : vector<8x384xf32>
    %c17_i32_30 = arith.constant 17 : i32
    %54 = tpu.dynamic_rotate %53 by %c17_i32_30 dim 1 : vector<8x384xf32>, i32 -> vector<8x384xf32>
    %c16_i32_31 = arith.constant 16 : i32
    %55 = tpu.dynamic_rotate %53 by %c16_i32_31 dim 1 : vector<8x384xf32>, i32 -> vector<8x384xf32>
    %c15_i32_32 = arith.constant 15 : i32
    %56 = tpu.dynamic_rotate %53 by %c15_i32_32 dim 1 : vector<8x384xf32>, i32 -> vector<8x384xf32>
    %c1_i32_33 = arith.constant 1 : i32
    %57 = tpu.dynamic_rotate %53 by %c1_i32_33 dim 1 : vector<8x384xf32>, i32 -> vector<8x384xf32>
    %c383_i32_34 = arith.constant 383 : i32
    %58 = tpu.dynamic_rotate %53 by %c383_i32_34 dim 1 : vector<8x384xf32>, i32 -> vector<8x384xf32>
    %c369_i32_35 = arith.constant 369 : i32
    %59 = tpu.dynamic_rotate %53 by %c369_i32_35 dim 1 : vector<8x384xf32>, i32 -> vector<8x384xf32>
    %c368_i32_36 = arith.constant 368 : i32
    %60 = tpu.dynamic_rotate %53 by %c368_i32_36 dim 1 : vector<8x384xf32>, i32 -> vector<8x384xf32>
    %c367_i32_37 = arith.constant 367 : i32
    %61 = tpu.dynamic_rotate %53 by %c367_i32_37 dim 1 : vector<8x384xf32>, i32 -> vector<8x384xf32>
    %62 = tpu.concatenate %54, %55, %56, %57, %53, %58, %59, %60, %61 in 0 : vector<8x384xf32>, vector<8x384xf32>, vector<8x384xf32>, vector<8x384xf32>, vector<8x384xf32>, vector<8x384xf32>, vector<8x384xf32>, vector<8x384xf32>, vector<8x384xf32> -> vector<72x384xf32>
    %c0_38 = arith.constant 0 : index
    %c0_39 = arith.constant 0 : index
    %63 = vector.load %arg12[%c0_38, %c0_39] : memref<8x72xf32, #tpu.memory_space<vmem>>, vector<8x72xf32>
    %cst_40 = arith.constant dense<0.000000e+00> : vector<8x384xf32>
    %64 = tpu.matmul %63, %62, %cst_40 {dimension_numbers = #tpu.dot_dimension_numbers<[1], [0], [0], [1], [0, 0, 1, 1], [], []>} : vector<8x72xf32>, vector<72x384xf32>, vector<8x384xf32> -> vector<8x384xf32>
    %c0_41 = arith.constant 0 : index
    %c0_42 = arith.constant 0 : index
    %65 = vector.load %arg13[%c0_41, %c0_42] : memref<8x1xf32, #tpu.memory_space<vmem>>, vector<8x1xf32>
    %66 = vector.broadcast %65 : vector<8x1xf32> to vector<8x384xf32>
    %67 = arith.addf %64, %66 : vector<8x384xf32>
    %cst_43 = arith.constant 0.000000e+00 : f32
    %68 = vector.broadcast %cst_43 : f32 to vector<8x384xf32>
    %69 = arith.cmpf oge, %67, %68 : vector<8x384xf32>
    %cst_44 = arith.constant 0.00999999977 : f32
    %70 = vector.broadcast %cst_44 : f32 to vector<8x384xf32>
    %71 = arith.mulf %67, %70 : vector<8x384xf32>
    %72 = arith.select %69, %67, %71 : vector<8x384xi1>, vector<8x384xf32>
    %73 = vector.broadcast %0 : vector<1x384xf32> to vector<8x384xf32>
    %74 = arith.mulf %72, %73 : vector<8x384xf32>
    %c0_45 = arith.constant 0 : index
    %c0_46 = arith.constant 0 : index
    %75 = vector.load %arg14[%c0_45, %c0_46] : memref<8x8xf32, #tpu.memory_space<vmem>>, vector<8x8xf32>
    %cst_47 = arith.constant dense<0.000000e+00> : vector<8x384xf32>
    %76 = tpu.matmul %75, %74, %cst_47 {dimension_numbers = #tpu.dot_dimension_numbers<[1], [0], [0], [1], [0, 0, 1, 1], [], []>} : vector<8x8xf32>, vector<8x384xf32>, vector<8x384xf32> -> vector<8x384xf32>
    %c0_48 = arith.constant 0 : index
    %c0_49 = arith.constant 0 : index
    %77 = vector.load %arg15[%c0_48, %c0_49] : memref<8x1xf32, #tpu.memory_space<vmem>>, vector<8x1xf32>
    %78 = vector.broadcast %77 : vector<8x1xf32> to vector<8x384xf32>
    %79 = arith.addf %76, %78 : vector<8x384xf32>
    %80 = arith.addf %79, %41 : vector<8x384xf32>
    %cst_50 = arith.constant 0.000000e+00 : f32
    %81 = vector.broadcast %cst_50 : f32 to vector<8x384xf32>
    %82 = arith.cmpf oge, %80, %81 : vector<8x384xf32>
    %cst_51 = arith.constant 0.00999999977 : f32
    %83 = vector.broadcast %cst_51 : f32 to vector<8x384xf32>
    %84 = arith.mulf %80, %83 : vector<8x384xf32>
    %85 = arith.select %82, %80, %84 : vector<8x384xi1>, vector<8x384xf32>
    %86 = vector.broadcast %0 : vector<1x384xf32> to vector<8x384xf32>
    %87 = arith.mulf %85, %86 : vector<8x384xf32>
    %c0_52 = arith.constant 0 : index
    %c0_53 = arith.constant 0 : index
    %88 = vector.load %arg16[%c0_52, %c0_53] : memref<8x8xf32, #tpu.memory_space<vmem>>, vector<8x8xf32>
    %cst_54 = arith.constant dense<0.000000e+00> : vector<8x384xf32>
    %89 = tpu.matmul %88, %87, %cst_54 {dimension_numbers = #tpu.dot_dimension_numbers<[1], [0], [0], [1], [0, 0, 1, 1], [], []>} : vector<8x8xf32>, vector<8x384xf32>, vector<8x384xf32> -> vector<8x384xf32>
    %c0_55 = arith.constant 0 : index
    %c0_56 = arith.constant 0 : index
    %90 = vector.load %arg17[%c0_55, %c0_56] : memref<8x1xf32, #tpu.memory_space<vmem>>, vector<8x1xf32>
    %91 = vector.broadcast %90 : vector<8x1xf32> to vector<8x384xf32>
    %92 = arith.addf %89, %91 : vector<8x384xf32>
    %cst_57 = arith.constant 0.000000e+00 : f32
    %93 = vector.broadcast %cst_57 : f32 to vector<8x384xf32>
    %94 = arith.cmpf oge, %92, %93 : vector<8x384xf32>
    %cst_58 = arith.constant 0.00999999977 : f32
    %95 = vector.broadcast %cst_58 : f32 to vector<8x384xf32>
    %96 = arith.mulf %92, %95 : vector<8x384xf32>
    %97 = arith.select %94, %92, %96 : vector<8x384xi1>, vector<8x384xf32>
    %98 = vector.broadcast %0 : vector<1x384xf32> to vector<8x384xf32>
    %99 = arith.mulf %97, %98 : vector<8x384xf32>
    %c17_i32_59 = arith.constant 17 : i32
    %100 = tpu.dynamic_rotate %99 by %c17_i32_59 dim 1 : vector<8x384xf32>, i32 -> vector<8x384xf32>
    %c16_i32_60 = arith.constant 16 : i32
    %101 = tpu.dynamic_rotate %99 by %c16_i32_60 dim 1 : vector<8x384xf32>, i32 -> vector<8x384xf32>
    %c15_i32_61 = arith.constant 15 : i32
    %102 = tpu.dynamic_rotate %99 by %c15_i32_61 dim 1 : vector<8x384xf32>, i32 -> vector<8x384xf32>
    %c1_i32_62 = arith.constant 1 : i32
    %103 = tpu.dynamic_rotate %99 by %c1_i32_62 dim 1 : vector<8x384xf32>, i32 -> vector<8x384xf32>
    %c383_i32_63 = arith.constant 383 : i32
    %104 = tpu.dynamic_rotate %99 by %c383_i32_63 dim 1 : vector<8x384xf32>, i32 -> vector<8x384xf32>
    %c369_i32_64 = arith.constant 369 : i32
    %105 = tpu.dynamic_rotate %99 by %c369_i32_64 dim 1 : vector<8x384xf32>, i32 -> vector<8x384xf32>
    %c368_i32_65 = arith.constant 368 : i32
    %106 = tpu.dynamic_rotate %99 by %c368_i32_65 dim 1 : vector<8x384xf32>, i32 -> vector<8x384xf32>
    %c367_i32_66 = arith.constant 367 : i32
    %107 = tpu.dynamic_rotate %99 by %c367_i32_66 dim 1 : vector<8x384xf32>, i32 -> vector<8x384xf32>
    %108 = tpu.concatenate %100, %101, %102, %103, %99, %104, %105, %106, %107 in 0 : vector<8x384xf32>, vector<8x384xf32>, vector<8x384xf32>, vector<8x384xf32>, vector<8x384xf32>, vector<8x384xf32>, vector<8x384xf32>, vector<8x384xf32>, vector<8x384xf32> -> vector<72x384xf32>
    %c0_67 = arith.constant 0 : index
    %c0_68 = arith.constant 0 : index
    %109 = vector.load %arg18[%c0_67, %c0_68] : memref<8x72xf32, #tpu.memory_space<vmem>>, vector<8x72xf32>
    %cst_69 = arith.constant dense<0.000000e+00> : vector<8x384xf32>
    %110 = tpu.matmul %109, %108, %cst_69 {dimension_numbers = #tpu.dot_dimension_numbers<[1], [0], [0], [1], [0, 0, 1, 1], [], []>} : vector<8x72xf32>, vector<72x384xf32>, vector<8x384xf32> -> vector<8x384xf32>
    %c0_70 = arith.constant 0 : index
    %c0_71 = arith.constant 0 : index
    %111 = vector.load %arg19[%c0_70, %c0_71] : memref<8x1xf32, #tpu.memory_space<vmem>>, vector<8x1xf32>
    %112 = vector.broadcast %111 : vector<8x1xf32> to vector<8x384xf32>
    %113 = arith.addf %110, %112 : vector<8x384xf32>
    %cst_72 = arith.constant 0.000000e+00 : f32
    %114 = vector.broadcast %cst_72 : f32 to vector<8x384xf32>
    %115 = arith.cmpf oge, %113, %114 : vector<8x384xf32>
    %cst_73 = arith.constant 0.00999999977 : f32
    %116 = vector.broadcast %cst_73 : f32 to vector<8x384xf32>
    %117 = arith.mulf %113, %116 : vector<8x384xf32>
    %118 = arith.select %115, %113, %117 : vector<8x384xi1>, vector<8x384xf32>
    %119 = vector.broadcast %0 : vector<1x384xf32> to vector<8x384xf32>
    %120 = arith.mulf %118, %119 : vector<8x384xf32>
    %c0_74 = arith.constant 0 : index
    %c0_75 = arith.constant 0 : index
    %121 = vector.load %arg20[%c0_74, %c0_75] : memref<8x8xf32, #tpu.memory_space<vmem>>, vector<8x8xf32>
    %cst_76 = arith.constant dense<0.000000e+00> : vector<8x384xf32>
    %122 = tpu.matmul %121, %120, %cst_76 {dimension_numbers = #tpu.dot_dimension_numbers<[1], [0], [0], [1], [0, 0, 1, 1], [], []>} : vector<8x8xf32>, vector<8x384xf32>, vector<8x384xf32> -> vector<8x384xf32>
    %c0_77 = arith.constant 0 : index
    %c0_78 = arith.constant 0 : index
    %123 = vector.load %arg21[%c0_77, %c0_78] : memref<8x1xf32, #tpu.memory_space<vmem>>, vector<8x1xf32>
    %124 = vector.broadcast %123 : vector<8x1xf32> to vector<8x384xf32>
    %125 = arith.addf %122, %124 : vector<8x384xf32>
    %126 = arith.addf %125, %87 : vector<8x384xf32>
    %cst_79 = arith.constant 0.000000e+00 : f32
    %127 = vector.broadcast %cst_79 : f32 to vector<8x384xf32>
    %128 = arith.cmpf oge, %126, %127 : vector<8x384xf32>
    %cst_80 = arith.constant 0.00999999977 : f32
    %129 = vector.broadcast %cst_80 : f32 to vector<8x384xf32>
    %130 = arith.mulf %126, %129 : vector<8x384xf32>
    %131 = arith.select %128, %126, %130 : vector<8x384xi1>, vector<8x384xf32>
    %132 = vector.broadcast %0 : vector<1x384xf32> to vector<8x384xf32>
    %133 = arith.mulf %131, %132 : vector<8x384xf32>
    %c0_81 = arith.constant 0 : index
    %c0_82 = arith.constant 0 : index
    %134 = vector.load %arg22[%c0_81, %c0_82] : memref<8x384xf32, #tpu.memory_space<vmem>>, vector<8x384xf32>
    tpu.vector_store %arg22[%c0_81, %c0_82], %133 {strides = array<i32>} : memref<8x384xf32, #tpu.memory_space<vmem>>, vector<8x384xf32>,
    return
  }
  func.func @transform_0(%arg0: i32) -> (i32, i32) {
    %c0_i32 = arith.constant 0 : i32
    %c0_i32_0 = arith.constant 0 : i32
    %c0_i32_1 = arith.constant 0 : i32
    return %c0_i32, %c0_i32_0 : i32, i32
  }
  func.func @transform_1(%arg0: i32) -> (i32, i32) {
    %c0_i32 = arith.constant 0 : i32
    %c0_i32_0 = arith.constant 0 : i32
    %c0_i32_1 = arith.constant 0 : i32
    return %c0_i32, %c0_i32_0 : i32, i32
  }
  func.func @transform_2(%arg0: i32) -> (i32, i32) {
    %c0_i32 = arith.constant 0 : i32
    %c0_i32_0 = arith.constant 0 : i32
    %c0_i32_1 = arith.constant 0 : i32
    return %c0_i32, %c0_i32_0 : i32, i32
  }
  func.func @transform_3(%arg0: i32) -> (i32, i32) {
    %c0_i32 = arith.constant 0 : i32
    %c0_i32_0 = arith.constant 0 : i32
    %c0_i32_1 = arith.constant 0 : i32
    return %c0_i32, %c0_i32_0 : i32, i32
  }
  func.func @transform_4(%arg0: i32) -> (i32, i32) {
    %c0_i32 = arith.constant 0 : i32
    %c0_i32_0 = arith.constant 0 : i32
    %c0_i32_1 = arith.constant 0 : i32
    return %c0_i32, %c0_i32_0 : i32, i32
  }
  func.func @transform_5(%arg0: i32) -> (i32, i32) {
    %c0_i32 = arith.constant 0 : i32
    %c0_i32_0 = arith.constant 0 : i32
    %c0_i32_1 = arith.constant 0 : i32
    return %c0_i32, %c0_i32_0 : i32, i32
  }
  func.func @transform_6(%arg0: i32) -> (i32, i32) {
    %c0_i32 = arith.constant 0 : i32
    %c0_i32_0 = arith.constant 0 : i32
    %c0_i32_1 = arith.constant 0 : i32
    return %c0_i32, %c0_i32_0 : i32, i32
  }
  func.func @transform_7(%arg0: i32) -> (i32, i32) {
    %c0_i32 = arith.constant 0 : i32
    %c0_i32_0 = arith.constant 0 : i32
    %c0_i32_1 = arith.constant 0 : i32
    return %c0_i32, %c0_i32_0 : i32, i32
  }
  func.func @transform_8(%arg0: i32) -> (i32, i32) {
    %c0_i32 = arith.constant 0 : i32
    %c0_i32_0 = arith.constant 0 : i32
    %c0_i32_1 = arith.constant 0 : i32
    return %c0_i32, %c0_i32_0 : i32, i32
  }
  func.func @transform_9(%arg0: i32) -> (i32, i32) {
    %c0_i32 = arith.constant 0 : i32
    %c0_i32_0 = arith.constant 0 : i32
    %c0_i32_1 = arith.constant 0 : i32
    return %c0_i32, %c0_i32_0 : i32, i32
  }
  func.func @transform_10(%arg0: i32) -> (i32, i32) {
    %c0_i32 = arith.constant 0 : i32
    %c0_i32_0 = arith.constant 0 : i32
    %c0_i32_1 = arith.constant 0 : i32
    return %c0_i32, %c0_i32_0 : i32, i32
  }
  func.func @transform_11(%arg0: i32) -> (i32, i32) {
    %c0_i32 = arith.constant 0 : i32
    %c0_i32_0 = arith.constant 0 : i32
    %c0_i32_1 = arith.constant 0 : i32
    return %c0_i32, %c0_i32_0 : i32, i32
  }
  func.func @transform_12(%arg0: i32) -> (i32, i32) {
    %c0_i32 = arith.constant 0 : i32
    %c0_i32_0 = arith.constant 0 : i32
    %c0_i32_1 = arith.constant 0 : i32
    return %c0_i32, %c0_i32_0 : i32, i32
  }
  func.func @transform_13(%arg0: i32) -> (i32, i32) {
    %c0_i32 = arith.constant 0 : i32
    %c0_i32_0 = arith.constant 0 : i32
    %c0_i32_1 = arith.constant 0 : i32
    return %c0_i32, %c0_i32_0 : i32, i32
  }
  func.func @transform_14(%arg0: i32) -> (i32, i32) {
    %c0_i32 = arith.constant 0 : i32
    %c0_i32_0 = arith.constant 0 : i32
    %c0_i32_1 = arith.constant 0 : i32
    return %c0_i32, %c0_i32_0 : i32, i32
  }
  func.func @transform_15(%arg0: i32) -> (i32, i32) {
    %c0_i32 = arith.constant 0 : i32
    %c0_i32_0 = arith.constant 0 : i32
    %c0_i32_1 = arith.constant 0 : i32
    return %c0_i32, %c0_i32_0 : i32, i32
  }
  func.func @transform_16(%arg0: i32) -> (i32, i32) {
    %c0_i32 = arith.constant 0 : i32
    %c0_i32_0 = arith.constant 0 : i32
    %c0_i32_1 = arith.constant 0 : i32
    return %c0_i32, %c0_i32_0 : i32, i32
  }
  func.func @transform_17(%arg0: i32) -> (i32, i32) {
    %c0_i32 = arith.constant 0 : i32
    %c0_i32_0 = arith.constant 0 : i32
    %c0_i32_1 = arith.constant 0 : i32
    return %c0_i32, %c0_i32_0 : i32, i32
  }
  func.func @transform_18(%arg0: i32) -> (i32, i32) {
    %c0_i32 = arith.constant 0 : i32
    %c0_i32_0 = arith.constant 0 : i32
    %c0_i32_1 = arith.constant 0 : i32
    return %c0_i32, %c0_i32_0 : i32, i32
  }
  func.func @transform_19(%arg0: i32) -> (i32, i32) {
    %c0_i32 = arith.constant 0 : i32
    %c0_i32_0 = arith.constant 0 : i32
    %c0_i32_1 = arith.constant 0 : i32
    return %c0_i32, %c0_i32_0 : i32, i32
  }
  func.func @transform_20(%arg0: i32) -> (i32, i32) {
    %c0_i32 = arith.constant 0 : i32
    %c0_i32_0 = arith.constant 0 : i32
    %c0_i32_1 = arith.constant 0 : i32
    return %c0_i32, %c0_i32_0 : i32, i32
  }
  func.func @transform_21(%arg0: i32) -> (i32, i32) {
    %c0_i32 = arith.constant 0 : i32
    %c0_i32_0 = arith.constant 0 : i32
    %c0_i32_1 = arith.constant 0 : i32
    return %c0_i32, %c0_i32_0 : i32, i32
  }
}

</mosaic_0001>

<llo_original>
// kernel: tpu_custom_call.1
$region0: #{tpu_custom_call.1}
  #allocation0 [shape = 'u32[]', space=smem, size = 0x4, offset = 0x4, fixed_abs, tag = 'smem constant byte address 0x4 - core index']
  #allocation1 [shape = 'u32[144,128]{1,0:T(1,128)}', space=vmem, size = 0x12000, scoped, tag = 'internal scratch']
  %s0 = inlined_call_operand.hbm [shape: f32[72,384], index: 0, kind: input, shape index: {}]
  %s1 = inlined_call_operand.vmem [shape: f32[8,384], index: 1, kind: input, shape index: {}]
  %s2 = inlined_call_operand.hbm [shape: f32[1,384], index: 2, kind: input, shape index: {}]
  %s3 = inlined_call_operand.vmem [shape: f32[8,72], index: 3, kind: input, shape index: {}]
  %s4 = inlined_call_operand.vmem [shape: f32[8,1], index: 4, kind: input, shape index: {}]
  %s5 = inlined_call_operand.vmem [shape: f32[8,72], index: 5, kind: input, shape index: {}]
  %s6 = inlined_call_operand.vmem [shape: f32[8,1], index: 6, kind: input, shape index: {}]
  %s7 = inlined_call_operand.vmem [shape: f32[8,8], index: 7, kind: input, shape index: {}]
  %s8 = inlined_call_operand.vmem [shape: f32[8,1], index: 8, kind: input, shape index: {}]
  %s9 = inlined_call_operand.vmem [shape: f32[8,8], index: 9, kind: input, shape index: {}]
  %s10 = inlined_call_operand.vmem [shape: f32[8,1], index: 10, kind: input, shape index: {}]
  %s11 = inlined_call_operand.vmem [shape: f32[8,72], index: 11, kind: input, shape index: {}]
  %s12 = inlined_call_operand.vmem [shape: f32[8,1], index: 12, kind: input, shape index: {}]
  %s13 = inlined_call_operand.vmem [shape: f32[8,8], index: 13, kind: input, shape index: {}]
  %s14 = inlined_call_operand.vmem [shape: f32[8,1], index: 14, kind: input, shape index: {}]
  %s15 = inlined_call_operand.vmem [shape: f32[8,8], index: 15, kind: input, shape index: {}]
  %s16 = inlined_call_operand.vmem [shape: f32[8,1], index: 16, kind: input, shape index: {}]
  %s17 = inlined_call_operand.vmem [shape: f32[8,72], index: 17, kind: input, shape index: {}]
  %s18 = inlined_call_operand.vmem [shape: f32[8,1], index: 18, kind: input, shape index: {}]
  %s19 = inlined_call_operand.vmem [shape: f32[8,8], index: 19, kind: input, shape index: {}]
  %s20 = inlined_call_operand.vmem [shape: f32[8,1], index: 20, kind: input, shape index: {}]
  %s21 = inlined_call_operand.hbm [shape: f32[8,384], index: 21, kind: output, shape index: {}]
  %s22 = sld [smem:[#allocation0]]
  $region102: #{tpu_custom_call.1} parent=0
    _
  %s24 = ssub.s32 1, %s22
  %s25 = scalar_select 0, %s24, %s22
  $region1: #{tpu_custom_call.1} parent=0
    #allocation2 [shape = 'u8[110592]{0}', space=vmem, size = 0x1b000, scoped, tag = 'input window, operand 0, single buffered']
    #allocation3 [shape = 's32[1]{0}', space=sflag, size = 0x4, scoped, tag = 'scoped memory for tpu_custom_call.1']
    #allocation4 [shape = 's32[1]{0}', space=sflag, size = 0x4, scoped, tag = 'scoped memory for tpu_custom_call.1']
    #allocation5 [shape = 'u8[1536]{0}', space=vmem, size = 0x800, scoped, tag = 'input window, operand 2, single buffered']
    #allocation6 [shape = 's32[1]{0}', space=sflag, size = 0x4, scoped, tag = 'scoped memory for tpu_custom_call.1']
    #allocation7 [shape = 'u8[12288]{0}', space=vmem, size = 0x3000, scoped, tag = 'output window, operand 0, single buffered']
    %26 = vsyncpa [#allocation3], 0
    %27 = vsyncpa [#allocation6], 0
    %28 = vsyncpa [#allocation4], 0
    // Predicated region
    $region2: #{tpu_custom_call.1} parent=1 // pred_check
      _
    $region3: #{tpu_custom_call.1} parent=1 // pred_check_branch
      %30 = sbr.rel (0) target = $region5
    $region4: #{tpu_custom_call.1} parent=1 // pred_region
      %s32 = ssub.s32 3456, 3456
      %33 = vsyncadd [#allocation3], %s32
      %s34 = sshll.u32 [#allocation2], 4
      %s35 = int_to_ptr.vmem [resolvable:$true] %s34
      %40 = dma.hbm_to_vmem [thread:$0]  %s0, 3456, %s35, [#allocation3], 384, 384, 24
    $region5: #{tpu_custom_call.1} parent=1 // pred_fallthru
      _
    // Predicated region
    $region6: #{tpu_custom_call.1} parent=1 // pred_check
      _
    $region7: #{tpu_custom_call.1} parent=1 // pred_check_branch
      %42 = sbr.rel (0) target = $region9
    $region8: #{tpu_custom_call.1} parent=1 // pred_region
      _
    $region9: #{tpu_custom_call.1} parent=1 // pred_fallthru
      _
    // Predicated region
    $region10: #{tpu_custom_call.1} parent=1 // pred_check
      _
    $region11: #{tpu_custom_call.1} parent=1 // pred_check_branch
      %44 = sbr.rel (0) target = $region13
    $region12: #{tpu_custom_call.1} parent=1 // pred_region
      %s46 = ssub.s32 48, 48
      %47 = vsyncadd [#allocation6], %s46
      %s49 = sshll.u32 [#allocation5], 4
      %s50 = int_to_ptr.vmem [resolvable:$true] %s49
      %52 = dma.hbm_to_vmem [thread:$0]  %s2, 48, %s50, [#allocation6]
    $region13: #{tpu_custom_call.1} parent=1 // pred_fallthru
      _
    // Predicated region
    $region14: #{tpu_custom_call.1} parent=1 // pred_check
      _
    $region15: #{tpu_custom_call.1} parent=1 // pred_check_branch
      %54 = sbr.rel (0) target = $region17
    $region16: #{tpu_custom_call.1} parent=1 // pred_region
      _
    $region17: #{tpu_custom_call.1} parent=1 // pred_fallthru
      _
    // Predicated region
    $region18: #{tpu_custom_call.1} parent=1 // pred_check
      _
    $region19: #{tpu_custom_call.1} parent=1 // pred_check_branch
      %56 = sbr.rel (0) target = $region21
    $region20: #{tpu_custom_call.1} parent=1 // pred_region
      _
    $region21: #{tpu_custom_call.1} parent=1 // pred_fallthru
      _
    // Predicated region
    $region22: #{tpu_custom_call.1} parent=1 // pred_check
      _
    $region23: #{tpu_custom_call.1} parent=1 // pred_check_branch
      %58 = sbr.rel (0) target = $region25
    $region24: #{tpu_custom_call.1} parent=1 // pred_region
      _
    $region25: #{tpu_custom_call.1} parent=1 // pred_fallthru
      _
    // Predicated region
    $region26: #{tpu_custom_call.1} parent=1 // pred_check
      _
    $region27: #{tpu_custom_call.1} parent=1 // pred_check_branch
      %60 = sbr.rel (0) target = $region29
    $region28: #{tpu_custom_call.1} parent=1 // pred_region
      _
    $region29: #{tpu_custom_call.1} parent=1 // pred_fallthru
      _
    // Predicated region
    $region30: #{tpu_custom_call.1} parent=1 // pred_check
      _
    $region31: #{tpu_custom_call.1} parent=1 // pred_check_branch
      %62 = sbr.rel (0) target = $region33
    $region32: #{tpu_custom_call.1} parent=1 // pred_region
      _
    $region33: #{tpu_custom_call.1} parent=1 // pred_fallthru
      _
    // Predicated region
    $region34: #{tpu_custom_call.1} parent=1 // pred_check
      _
    $region35: #{tpu_custom_call.1} parent=1 // pred_check_branch
      %64 = sbr.rel (0) target = $region37
    $region36: #{tpu_custom_call.1} parent=1 // pred_region
      _
    $region37: #{tpu_custom_call.1} parent=1 // pred_fallthru
      _
    // Predicated region
    $region38: #{tpu_custom_call.1} parent=1 // pred_check
      _
    $region39: #{tpu_custom_call.1} parent=1 // pred_check_branch
      %66 = sbr.rel (0) target = $region41
    $region40: #{tpu_custom_call.1} parent=1 // pred_region
      _
    $region41: #{tpu_custom_call.1} parent=1 // pred_fallthru
      _
    // Predicated region
    $region42: #{tpu_custom_call.1} parent=1 // pred_check
      _
    $region43: #{tpu_custom_call.1} parent=1 // pred_check_branch
      %68 = sbr.rel (0) target = $region45
    $region44: #{tpu_custom_call.1} parent=1 // pred_region
      _
    $region45: #{tpu_custom_call.1} parent=1 // pred_fallthru
      _
    // Predicated region
    $region46: #{tpu_custom_call.1} parent=1 // pred_check
      _
    $region47: #{tpu_custom_call.1} parent=1 // pred_check_branch
      %70 = sbr.rel (0) target = $region49
    $region48: #{tpu_custom_call.1} parent=1 // pred_region
      _
    $region49: #{tpu_custom_call.1} parent=1 // pred_fallthru
      _
    // Predicated region
    $region50: #{tpu_custom_call.1} parent=1 // pred_check
      _
    $region51: #{tpu_custom_call.1} parent=1 // pred_check_branch
      %72 = sbr.rel (0) target = $region53
    $region52: #{tpu_custom_call.1} parent=1 // pred_region
      _
    $region53: #{tpu_custom_call.1} parent=1 // pred_fallthru
      _
    // Predicated region
    $region54: #{tpu_custom_call.1} parent=1 // pred_check
      _
    $region55: #{tpu_custom_call.1} parent=1 // pred_check_branch
      %74 = sbr.rel (0) target = $region57
    $region56: #{tpu_custom_call.1} parent=1 // pred_region
      _
    $region57: #{tpu_custom_call.1} parent=1 // pred_fallthru
      _
    // Predicated region
    $region58: #{tpu_custom_call.1} parent=1 // pred_check
      _
    $region59: #{tpu_custom_call.1} parent=1 // pred_check_branch
      %76 = sbr.rel (0) target = $region61
    $region60: #{tpu_custom_call.1} parent=1 // pred_region
      _
    $region61: #{tpu_custom_call.1} parent=1 // pred_fallthru
      _
    // Predicated region
    $region62: #{tpu_custom_call.1} parent=1 // pred_check
      _
    $region63: #{tpu_custom_call.1} parent=1 // pred_check_branch
      %78 = sbr.rel (0) target = $region65
    $region64: #{tpu_custom_call.1} parent=1 // pred_region
      _
    $region65: #{tpu_custom_call.1} parent=1 // pred_fallthru
      _
    // Predicated region
    $region66: #{tpu_custom_call.1} parent=1 // pred_check
      _
    $region67: #{tpu_custom_call.1} parent=1 // pred_check_branch
      %80 = sbr.rel (0) target = $region69
    $region68: #{tpu_custom_call.1} parent=1 // pred_region
      _
    $region69: #{tpu_custom_call.1} parent=1 // pred_fallthru
      _
    // Predicated region
    $region70: #{tpu_custom_call.1} parent=1 // pred_check
      _
    $region71: #{tpu_custom_call.1} parent=1 // pred_check_branch
      %82 = sbr.rel (0) target = $region73
    $region72: #{tpu_custom_call.1} parent=1 // pred_region
      _
    $region73: #{tpu_custom_call.1} parent=1 // pred_fallthru
      _
    // Predicated region
    $region74: #{tpu_custom_call.1} parent=1 // pred_check
      _
    $region75: #{tpu_custom_call.1} parent=1 // pred_check_branch
      %84 = sbr.rel (0) target = $region77
    $region76: #{tpu_custom_call.1} parent=1 // pred_region
      _
    $region77: #{tpu_custom_call.1} parent=1 // pred_fallthru
      _
    // Predicated region
    $region78: #{tpu_custom_call.1} parent=1 // pred_check
      _
    $region79: #{tpu_custom_call.1} parent=1 // pred_check_branch
      %86 = sbr.rel (0) target = $region81
    $region80: #{tpu_custom_call.1} parent=1 // pred_region
      _
    $region81: #{tpu_custom_call.1} parent=1 // pred_fallthru
      _
    // Predicated region
    $region82: #{tpu_custom_call.1} parent=1 // pred_check
      _
    $region83: #{tpu_custom_call.1} parent=1 // pred_check_branch
      %88 = sbr.rel (0) target = $region85
    $region84: #{tpu_custom_call.1} parent=1 // pred_region
      _
    $region85: #{tpu_custom_call.1} parent=1 // pred_fallthru
      _
    // Predicated region
    $region86: #{tpu_custom_call.1} parent=1 // pred_check
      _
    $region87: #{tpu_custom_call.1} parent=1 // pred_check_branch
      %90 = sbr.rel (0) target = $region89
    $region88: #{tpu_custom_call.1} parent=1 // pred_region
      %91 = dma.done [#allocation3], 3456
    $region89: #{tpu_custom_call.1} parent=1 // pred_fallthru
      _
    // Predicated region
    $region90: #{tpu_custom_call.1} parent=1 // pred_check
      _
    $region91: #{tpu_custom_call.1} parent=1 // pred_check_branch
      %93 = sbr.rel (0) target = $region93
    $region92: #{tpu_custom_call.1} parent=1 // pred_region
      %94 = dma.done [#allocation6], 48
    $region93: #{tpu_custom_call.1} parent=1 // pred_fallthru
      _
    %v95 = vld [vmem:[#allocation5] sm:$0x7]
    %v96 = vld [vmem:[#allocation2] sm:$0xff]
    %v97 = vld [vmem:[#allocation2 + $0x8] sm:$0xff]
    %v98 = vld [vmem:[#allocation2 + $0x10] sm:$0xff]
    %v99 = vld [vmem:[#allocation2 + $0x18] sm:$0xff]
    %v100 = vld [vmem:[#allocation2 + $0x20] sm:$0xff]
    %v101 = vld [vmem:[#allocation2 + $0x28] sm:$0xff]
    %v102 = vld [vmem:[#allocation2 + $0x30] sm:$0xff]
    %v103 = vld [vmem:[#allocation2 + $0x38] sm:$0xff]
    %v104 = vld [vmem:[#allocation2 + $0x40] sm:$0xff]
    %v105 = vld [vmem:[#allocation2 + $0x48] sm:$0xff]
    %v106 = vld [vmem:[#allocation2 + $0x50] sm:$0xff]
    %v107 = vld [vmem:[#allocation2 + $0x58] sm:$0xff]
    %v108 = vld [vmem:[#allocation2 + $0x60] sm:$0xff]
    %v109 = vld [vmem:[#allocation2 + $0x68] sm:$0xff]
    %v110 = vld [vmem:[#allocation2 + $0x70] sm:$0xff]
    %v111 = vld [vmem:[#allocation2 + $0x78] sm:$0xff]
    %v112 = vld [vmem:[#allocation2 + $0x80] sm:$0xff]
    %v113 = vld [vmem:[#allocation2 + $0x88] sm:$0xff]
    %v114 = vld [vmem:[#allocation2 + $0x90] sm:$0xff]
    %v115 = vld [vmem:[#allocation2 + $0x98] sm:$0xff]
    %v116 = vld [vmem:[#allocation2 + $0xa0] sm:$0xff]
    %v117 = vld [vmem:[#allocation2 + $0xa8] sm:$0xff]
    %v118 = vld [vmem:[#allocation2 + $0xb0] sm:$0xff]
    %v119 = vld [vmem:[#allocation2 + $0xb8] sm:$0xff]
    %v120 = vld [vmem:[#allocation2 + $0xc0] sm:$0xff]
    %v121 = vld [vmem:[#allocation2 + $0xc8] sm:$0xff]
    %v122 = vld [vmem:[#allocation2 + $0xd0] sm:$0xff]
    %v123 = vld [vmem:[%s3] sm:$0xff]
    %v124 = vld [vmem:[%s4] sm:$0xff]
    %126 = vset.pattern.permute.xlu0 0
    %127 = vperm.xlu0 %126, %v124
    %v128 = vpop.permute.xlu0 %127
    %vm130 = vcmask 588800
    %v132 = vsel %vm130, %v123, 0
    %134 = vmatprep.subr.mxu0 %v97
    %135 = vmatpush1.msra.mxu0 %v96
    %136 = vmatprep.subr.mxu0 %v100
    %137 = vmatpush1.msra.mxu0 %v99
    %138 = vmatprep.subr.mxu0 %v103
    %139 = vmatpush1.msra.mxu0 %v102
    %140 = vmatprep.subr.mxu0 %v106
    %141 = vmatpush1.msra.mxu0 %v105
    %142 = vmatprep.subr.mxu0 %v109
    %143 = vmatpush1.msra.mxu0 %v108
    %144 = vmatprep.subr.mxu0 %v112
    %145 = vmatpush1.msra.mxu0 %v111
    %146 = vmatprep.subr.mxu0 %v115
    %147 = vmatpush1.msra.mxu0 %v114
    %148 = vmatprep.subr.mxu0 %v118
    %149 = vmatpush1.msra.mxu0 %v117
    %150 = vmatprep.subr.mxu0 %v121
    %151 = vmatpush1.msra.mxu0 %v120
    %152 = vmatprep.subr.mxu0 0.0
    %153 = vmatpush1.msra.mxu0 0.0
    %154 = vmatprep.subr.mxu0 0.0
    %155 = vmatpush1.msra.mxu0 0.0
    %156 = vmatprep.subr.mxu0 0.0
    %157 = vmatpush1.msra.mxu0 0.0
    %158 = vmatprep.subr.mxu0 0.0
    %159 = vmatpush1.msra.mxu0 0.0
    %160 = vmatprep.subr.mxu0 0.0
    %161 = vmatpush1.msra.mxu0 0.0
    %162 = vmatprep.subr.mxu0 0.0
    %163 = vmatpush1.msra.mxu0 0.0
    %164 = vmatprep.subr.mxu0 0.0
    %165 = vmatpush1.msra.mxu0 0.0
    %166 = vmatprep.subr.mxu0 0.0
    %167 = vmatpush1.msra.mxu0 0.0
    %168 = vmatprep.subr.mxu0 0.0
    %169 = vmatpush1.msra.mxu0 0.0
    %170 = vmatprep.subr.mxu0 0.0
    %171 = vmatpush1.msra.mxu0 0.0
    %172 = vmatprep.subr.mxu0 0.0
    %173 = vmatpush1.msra.mxu0 0.0
    %174 = vmatprep.subr.mxu0 0.0
    %175 = vmatpush1.msra.mxu0 0.0
    %176 = vmatprep.subr.mxu0 0.0
    %177 = vmatpush1.msra.mxu0 0.0
    %178 = vmatprep.subr.mxu0 0.0
    %179 = vmatpush1.msra.mxu0 0.0
    %180 = vmatprep.subr.mxu0 0.0
    %181 = vmatpush1.msra.mxu0 0.0
    %182 = vmatprep.subr.mxu0 0.0
    %183 = vmatpush1.msra.mxu0 0.0
    %184 = vmatprep.subr.mxu0 0.0
    %185 = vmatpush1.msra.mxu0 0.0
    %186 = vmatprep.subr.mxu0 0.0
    %187 = vmatpush1.msra.mxu0 0.0
    %188 = vmatprep.subr.mxu0 0.0
    %189 = vmatpush1.msra.mxu0 0.0
    %190 = vmatprep.subr.mxu0 0.0
    %191 = vmatpush1.msra.mxu0 0.0
    %192 = vmatprep.subr.mxu0 0.0
    %193 = vmatpush1.msra.mxu0 0.0
    %194 = vmatprep.subr.mxu0 0.0
    %195 = vmatpush1.msra.mxu0 0.0
    %196 = vmatprep.subr.mxu0 0.0
    %197 = vmatpush1.msra.mxu0 0.0
    %198 = vmatprep.mubr.f32.mxu0 0.0
    %199 = vmatmul.mubr.f32.gmra.mrb[0].mxu0 %v132
    %v200 = vpop.f32.mrb[0].mxu0
    %v201 = vadd.f32 %v128, %v200
    %v202 = vpop.f32.mrb[0].mxu0
    %v203 = vadd.f32 %v128, %v202
    %204 = vdwg.mxu0
    %205 = vmatprep.subr.mxu0 0.0
    %206 = vmatpush1.msra.mxu0 %v98
    %207 = vmatprep.subr.mxu0 0.0
    %208 = vmatpush1.msra.mxu0 %v101
    %209 = vmatprep.subr.mxu0 0.0
    %210 = vmatpush1.msra.mxu0 %v104
    %211 = vmatprep.subr.mxu0 0.0
    %212 = vmatpush1.msra.mxu0 %v107
    %213 = vmatprep.subr.mxu0 0.0
    %214 = vmatpush1.msra.mxu0 %v110
    %215 = vmatprep.subr.mxu0 0.0
    %216 = vmatpush1.msra.mxu0 %v113
    %217 = vmatprep.subr.mxu0 0.0
    %218 = vmatpush1.msra.mxu0 %v116
    %219 = vmatprep.subr.mxu0 0.0
    %220 = vmatpush1.msra.mxu0 %v119
    %221 = vmatprep.subr.mxu0 0.0
    %222 = vmatpush1.msra.mxu0 %v122
    %223 = vmatprep.subr.mxu0 0.0
    %224 = vmatpush1.msra.mxu0 0.0
    %225 = vmatprep.subr.mxu0 0.0
    %226 = vmatpush1.msra.mxu0 0.0
    %227 = vmatprep.subr.mxu0 0.0
    %228 = vmatpush1.msra.mxu0 0.0
    %229 = vmatprep.subr.mxu0 0.0
    %230 = vmatpush1.msra.mxu0 0.0
    %231 = vmatprep.subr.mxu0 0.0
    %232 = vmatpush1.msra.mxu0 0.0
    %233 = vmatprep.subr.mxu0 0.0
    %234 = vmatpush1.msra.mxu0 0.0
    %235 = vmatprep.subr.mxu0 0.0
    %236 = vmatpush1.msra.mxu0 0.0
    %237 = vmatprep.subr.mxu0 0.0
    %238 = vmatpush1.msra.mxu0 0.0
    %239 = vmatprep.subr.mxu0 0.0
    %240 = vmatpush1.msra.mxu0 0.0
    %241 = vmatprep.subr.mxu0 0.0
    %242 = vmatpush1.msra.mxu0 0.0
    %243 = vmatprep.subr.mxu0 0.0
    %244 = vmatpush1.msra.mxu0 0.0
    %245 = vmatprep.subr.mxu0 0.0
    %246 = vmatpush1.msra.mxu0 0.0
    %247 = vmatprep.subr.mxu0 0.0
    %248 = vmatpush1.msra.mxu0 0.0
    %249 = vmatprep.subr.mxu0 0.0
    %250 = vmatpush1.msra.mxu0 0.0
    %251 = vmatprep.subr.mxu0 0.0
    %252 = vmatpush1.msra.mxu0 0.0
    %253 = vmatprep.subr.mxu0 0.0
    %254 = vmatpush1.msra.mxu0 0.0
    %255 = vmatprep.subr.mxu0 0.0
    %256 = vmatpush1.msra.mxu0 0.0
    %257 = vmatprep.subr.mxu0 0.0
    %258 = vmatpush1.msra.mxu0 0.0
    %259 = vmatprep.subr.mxu0 0.0
    %260 = vmatpush1.msra.mxu0 0.0
    %261 = vmatprep.subr.mxu0 0.0
    %262 = vmatpush1.msra.mxu0 0.0
    %263 = vmatprep.subr.mxu0 0.0
    %264 = vmatpush1.msra.mxu0 0.0
    %265 = vmatprep.subr.mxu0 0.0
    %266 = vmatpush1.msra.mxu0 0.0
    %267 = vmatprep.subr.mxu0 0.0
    %268 = vmatpush1.msra.mxu0 0.0
    %269 = vmatprep.mubr.f32.mxu0 0.0
    %270 = vmatmul.mubr.f32.gmra.mrb[0].mxu0 %v132
    %v271 = vpop.f32.mrb[0].mxu0
    %v272 = vadd.f32 %v128, %v271
    %v273 = vpop.f32.mrb[0].mxu0
    %274 = vdwg.mxu0
    %vm275 = vcmp.ge.f32.partialorder %v201, 0.0
    %vm276 = vcmp.ge.f32.partialorder %v203, 0.0
    %vm277 = vcmp.ge.f32.partialorder %v272, 0.0
    %v278 = vmul.f32 %v201, 0.01
    %v279 = vmul.f32 %v203, 0.01
    %v280 = vmul.f32 %v272, 0.01
    %v281 = vsel %vm275, %v201, %v278
    %v282 = vsel %vm276, %v203, %v279
    %v283 = vsel %vm277, %v272, %v280
    %v285 = vlaneseq
    %v286 = vshrl.u32 %v285, 7
    %v287 = vsub.s32 0, %v286
    %v288 = vrot.slane %v95, %v287
    %v289 = vlaneseq
    %v290 = vshrl.u32 %v289, 7
    %v291 = vsub.s32 1, %v290
    %v292 = vrot.slane %v95, %v291
    %v293 = vlaneseq
    %v294 = vshrl.u32 %v293, 7
    %v295 = vsub.s32 2, %v294
    %v296 = vrot.slane %v95, %v295
    %v300 = vmul.f32 %v281, %v288
    %v301 = vmul.f32 %v282, %v292
    %v302 = vmul.f32 %v283, %v296
    %v303 = vld [vmem:[%s1] sm:$0xff]
    %v304 = vld [vmem:[%s1 + $0x8] sm:$0xff]
    %v305 = vld [vmem:[%s1 + $0x10] sm:$0xff]
    %v306 = vld [vmem:[%s7] sm:$0xff]
    %v307 = vld [vmem:[%s8] sm:$0xff]
    %309 = vset.pattern.permute.xlu0 0
    %310 = vperm.xlu0 %309, %v307
    %v311 = vpop.permute.xlu0 %310
    %vm313 = vcmask 64512
    %v315 = vsel %vm313, %v306, 0
    %317 = vmatprep.subr.mxu0 %v304
    %318 = vmatpush1.msra.mxu0 %v303
    %319 = vmatprep.subr.mxu0 0.0
    %320 = vmatpush1.msra.mxu0 0.0
    %321 = vmatprep.subr.mxu0 0.0
    %322 = vmatpush1.msra.mxu0 0.0
    %323 = vmatprep.subr.mxu0 0.0
    %324 = vmatpush1.msra.mxu0 0.0
    %325 = vmatprep.subr.mxu0 0.0
    %326 = vmatpush1.msra.mxu0 0.0
    %327 = vmatprep.subr.mxu0 0.0
    %328 = vmatpush1.msra.mxu0 0.0
    %329 = vmatprep.subr.mxu0 0.0
    %330 = vmatpush1.msra.mxu0 0.0
    %331 = vmatprep.subr.mxu0 0.0
    %332 = vmatpush1.msra.mxu0 0.0
    %333 = vmatprep.subr.mxu0 0.0
    %334 = vmatpush1.msra.mxu0 0.0
    %335 = vmatprep.subr.mxu0 0.0
    %336 = vmatpush1.msra.mxu0 0.0
    %337 = vmatprep.subr.mxu0 0.0
    %338 = vmatpush1.msra.mxu0 0.0
    %339 = vmatprep.subr.mxu0 0.0
    %340 = vmatpush1.msra.mxu0 0.0
    %341 = vmatprep.subr.mxu0 0.0
    %342 = vmatpush1.msra.mxu0 0.0
    %343 = vmatprep.subr.mxu0 0.0
    %344 = vmatpush1.msra.mxu0 0.0
    %345 = vmatprep.subr.mxu0 0.0
    %346 = vmatpush1.msra.mxu0 0.0
    %347 = vmatprep.subr.mxu0 0.0
    %348 = vmatpush1.msra.mxu0 0.0
    %349 = vmatprep.subr.mxu0 0.0
    %350 = vmatpush1.msra.mxu0 0.0
    %351 = vmatprep.subr.mxu0 0.0
    %352 = vmatpush1.msra.mxu0 0.0
    %353 = vmatprep.subr.mxu0 0.0
    %354 = vmatpush1.msra.mxu0 0.0
    %355 = vmatprep.subr.mxu0 0.0
    %356 = vmatpush1.msra.mxu0 0.0
    %357 = vmatprep.subr.mxu0 0.0
    %358 = vmatpush1.msra.mxu0 0.0
    %359 = vmatprep.subr.mxu0 0.0
    %360 = vmatpush1.msra.mxu0 0.0
    %361 = vmatprep.subr.mxu0 0.0
    %362 = vmatpush1.msra.mxu0 0.0
    %363 = vmatprep.subr.mxu0 0.0
    %364 = vmatpush1.msra.mxu0 0.0
    %365 = vmatprep.subr.mxu0 0.0
    %366 = vmatpush1.msra.mxu0 0.0
    %367 = vmatprep.subr.mxu0 0.0
    %368 = vmatpush1.msra.mxu0 0.0
    %369 = vmatprep.subr.mxu0 0.0
    %370 = vmatpush1.msra.mxu0 0.0
    %371 = vmatprep.subr.mxu0 0.0
    %372 = vmatpush1.msra.mxu0 0.0
    %373 = vmatprep.subr.mxu0 0.0
    %374 = vmatpush1.msra.mxu0 0.0
    %375 = vmatprep.subr.mxu0 0.0
    %376 = vmatpush1.msra.mxu0 0.0
    %377 = vmatprep.subr.mxu0 0.0
    %378 = vmatpush1.msra.mxu0 0.0
    %379 = vmatprep.subr.mxu0 0.0
    %380 = vmatpush1.msra.mxu0 0.0
    %381 = vmatprep.mubr.f32.mxu0 0.0
    %382 = vmatmul.mubr.f32.gmra.mrb[0].mxu0 %v315
    %v383 = vpop.f32.mrb[0].mxu0
    %v384 = vadd.f32 %v311, %v383
    %v385 = vpop.f32.mrb[0].mxu0
    %v386 = vadd.f32 %v311, %v385
    %387 = vdwg.mxu0
    %388 = vmatprep.subr.mxu0 0.0
    %389 = vmatpush1.msra.mxu0 %v305
    %390 = vmatprep.subr.mxu0 0.0
    %391 = vmatpush1.msra.mxu0 0.0
    %392 = vmatprep.subr.mxu0 0.0
    %393 = vmatpush1.msra.mxu0 0.0
    %394 = vmatprep.subr.mxu0 0.0
    %395 = vmatpush1.msra.mxu0 0.0
    %396 = vmatprep.subr.mxu0 0.0
    %397 = vmatpush1.msra.mxu0 0.0
    %398 = vmatprep.subr.mxu0 0.0
    %399 = vmatpush1.msra.mxu0 0.0
    %400 = vmatprep.subr.mxu0 0.0
    %401 = vmatpush1.msra.mxu0 0.0
    %402 = vmatprep.subr.mxu0 0.0
    %403 = vmatpush1.msra.mxu0 0.0
    %404 = vmatprep.subr.mxu0 0.0
    %405 = vmatpush1.msra.mxu0 0.0
    %406 = vmatprep.subr.mxu0 0.0
    %407 = vmatpush1.msra.mxu0 0.0
    %408 = vmatprep.subr.mxu0 0.0
    %409 = vmatpush1.msra.mxu0 0.0
    %410 = vmatprep.subr.mxu0 0.0
    %411 = vmatpush1.msra.mxu0 0.0
    %412 = vmatprep.subr.mxu0 0.0
    %413 = vmatpush1.msra.mxu0 0.0
    %414 = vmatprep.subr.mxu0 0.0
    %415 = vmatpush1.msra.mxu0 0.0
    %416 = vmatprep.subr.mxu0 0.0
    %417 = vmatpush1.msra.mxu0 0.0
    %418 = vmatprep.subr.mxu0 0.0
    %419 = vmatpush1.msra.mxu0 0.0
    %420 = vmatprep.subr.mxu0 0.0
    %421 = vmatpush1.msra.mxu0 0.0
    %422 = vmatprep.subr.mxu0 0.0
    %423 = vmatpush1.msra.mxu0 0.0
    %424 = vmatprep.subr.mxu0 0.0
    %425 = vmatpush1.msra.mxu0 0.0
    %426 = vmatprep.subr.mxu0 0.0
    %427 = vmatpush1.msra.mxu0 0.0
    %428 = vmatprep.subr.mxu0 0.0
    %429 = vmatpush1.msra.mxu0 0.0
    %430 = vmatprep.subr.mxu0 0.0
    %431 = vmatpush1.msra.mxu0 0.0
    %432 = vmatprep.subr.mxu0 0.0
    %433 = vmatpush1.msra.mxu0 0.0
    %434 = vmatprep.subr.mxu0 0.0
    %435 = vmatpush1.msra.mxu0 0.0
    %436 = vmatprep.subr.mxu0 0.0
    %437 = vmatpush1.msra.mxu0 0.0
    %438 = vmatprep.subr.mxu0 0.0
    %439 = vmatpush1.msra.mxu0 0.0
    %440 = vmatprep.subr.mxu0 0.0
    %441 = vmatpush1.msra.mxu0 0.0
    %442 = vmatprep.subr.mxu0 0.0
    %443 = vmatpush1.msra.mxu0 0.0
    %444 = vmatprep.subr.mxu0 0.0
    %445 = vmatpush1.msra.mxu0 0.0
    %446 = vmatprep.subr.mxu0 0.0
    %447 = vmatpush1.msra.mxu0 0.0
    %448 = vmatprep.subr.mxu0 0.0
    %449 = vmatpush1.msra.mxu0 0.0
    %450 = vmatprep.subr.mxu0 0.0
    %451 = vmatpush1.msra.mxu0 0.0
    %452 = vmatprep.mubr.f32.mxu0 0.0
    %453 = vmatmul.mubr.f32.gmra.mrb[0].mxu0 %v315
    %v454 = vpop.f32.mrb[0].mxu0
    %v455 = vadd.f32 %v311, %v454
    %v456 = vpop.f32.mrb[0].mxu0
    %457 = vdwg.mxu0
    %458 = vrot.lane.b32.xlu0 %v300, 17
    %v459 = vpop.permute.xlu0 %458
    %460 = vrot.lane.b32.xlu0 %v301, 17
    %v461 = vpop.permute.xlu0 %460
    %462 = vrot.lane.b32.xlu0 %v302, 17
    %v463 = vpop.permute.xlu0 %462
    %v464 = vlaneseq
    %v465 = vand.u32 %v464, 127
    %vm466 = vcmp.lt.s32.totalorder %v465, 17
    %v467 = vsel %vm466, %v461, %v463
    %v468 = vsel %vm466, %v459, %v461
    %v469 = vsel %vm466, %v463, %v459
    %470 = vrot.lane.b32.xlu0 %v300, 16
    %v471 = vpop.permute.xlu0 %470
    %472 = vrot.lane.b32.xlu0 %v301, 16
    %v473 = vpop.permute.xlu0 %472
    %474 = vrot.lane.b32.xlu0 %v302, 16
    %v475 = vpop.permute.xlu0 %474
    %vm476 = vcmp.lt.s32.totalorder %v465, 16
    %v477 = vsel %vm476, %v473, %v475
    %v478 = vsel %vm476, %v471, %v473
    %v479 = vsel %vm476, %v475, %v471
    %480 = vrot.lane.b32.xlu0 %v300, 15
    %v481 = vpop.permute.xlu0 %480
    %482 = vrot.lane.b32.xlu0 %v301, 15
    %v483 = vpop.permute.xlu0 %482
    %484 = vrot.lane.b32.xlu0 %v302, 15
    %v485 = vpop.permute.xlu0 %484
    %vm486 = vcmp.lt.s32.totalorder %v465, 15
    %v487 = vsel %vm486, %v483, %v485
    %v488 = vsel %vm486, %v481, %v483
    %v489 = vsel %vm486, %v485, %v481
    %490 = vrot.lane.b32.xlu0 %v300, 1
    %v491 = vpop.permute.xlu0 %490
    %492 = vrot.lane.b32.xlu0 %v301, 1
    %v493 = vpop.permute.xlu0 %492
    %494 = vrot.lane.b32.xlu0 %v302, 1
    %v495 = vpop.permute.xlu0 %494
    %vm496 = vcmp.lt.s32.totalorder %v465, 1
    %v497 = vsel %vm496, %v493, %v495
    %v498 = vsel %vm496, %v491, %v493
    %v499 = vsel %vm496, %v495, %v491
    %500 = vrot.lane.b32.xlu0 %v300, 127
    %v501 = vpop.permute.xlu0 %500
    %502 = vrot.lane.b32.xlu0 %v301, 127
    %v503 = vpop.permute.xlu0 %502
    %504 = vrot.lane.b32.xlu0 %v302, 127
    %v505 = vpop.permute.xlu0 %504
    %vm506 = vcmp.lt.s32.totalorder %v465, 127
    %v507 = vsel %vm506, %v503, %v505
    %v508 = vsel %vm506, %v501, %v503
    %v509 = vsel %vm506, %v505, %v501
    %510 = vrot.lane.b32.xlu0 %v300, 113
    %v511 = vpop.permute.xlu0 %510
    %512 = vrot.lane.b32.xlu0 %v301, 113
    %v513 = vpop.permute.xlu0 %512
    %514 = vrot.lane.b32.xlu0 %v302, 113
    %v515 = vpop.permute.xlu0 %514
    %vm516 = vcmp.lt.s32.totalorder %v465, 113
    %v517 = vsel %vm516, %v513, %v515
    %v518 = vsel %vm516, %v511, %v513
    %v519 = vsel %vm516, %v515, %v511
    %520 = vrot.lane.b32.xlu0 %v300, 112
    %v521 = vpop.permute.xlu0 %520
    %522 = vrot.lane.b32.xlu0 %v301, 112
    %v523 = vpop.permute.xlu0 %522
    %524 = vrot.lane.b32.xlu0 %v302, 112
    %v525 = vpop.permute.xlu0 %524
    %vm526 = vcmp.lt.s32.totalorder %v465, 112
    %v527 = vsel %vm526, %v523, %v525
    %v528 = vsel %vm526, %v521, %v523
    %v529 = vsel %vm526, %v525, %v521
    %530 = vrot.lane.b32.xlu0 %v300, 111
    %v531 = vpop.permute.xlu0 %530
    %532 = vrot.lane.b32.xlu0 %v301, 111
    %v533 = vpop.permute.xlu0 %532
    %534 = vrot.lane.b32.xlu0 %v302, 111
    %v535 = vpop.permute.xlu0 %534
    %vm536 = vcmp.lt.s32.totalorder %v465, 111
    %v537 = vsel %vm536, %v533, %v535
    %v538 = vsel %vm536, %v531, %v533
    %v539 = vsel %vm536, %v535, %v531
    %v540 = vld [vmem:[%s5] sm:$0xff]
    %v541 = vld [vmem:[%s6] sm:$0xff]
    %543 = vset.pattern.permute.xlu0 0
    %544 = vperm.xlu0 %543, %v541
    %v545 = vpop.permute.xlu0 %544
    %v548 = vsel %vm130, %v540, 0
    %550 = vmatprep.subr.mxu0 %v468
    %551 = vmatpush1.msra.mxu0 %v469
    %552 = vmatprep.subr.mxu0 %v478
    %553 = vmatpush1.msra.mxu0 %v479
    %554 = vmatprep.subr.mxu0 %v488
    %555 = vmatpush1.msra.mxu0 %v489
    %556 = vmatprep.subr.mxu0 %v498
    %557 = vmatpush1.msra.mxu0 %v499
    %558 = vmatprep.subr.mxu0 %v301
    %559 = vmatpush1.msra.mxu0 %v300
    %560 = vmatprep.subr.mxu0 %v507
    %561 = vmatpush1.msra.mxu0 %v508
    %562 = vmatprep.subr.mxu0 %v517
    %563 = vmatpush1.msra.mxu0 %v518
    %564 = vmatprep.subr.mxu0 %v527
    %565 = vmatpush1.msra.mxu0 %v528
    %566 = vmatprep.subr.mxu0 %v537
    %567 = vmatpush1.msra.mxu0 %v538
    %568 = vmatprep.subr.mxu0 0.0
    %569 = vmatpush1.msra.mxu0 0.0
    %570 = vmatprep.subr.mxu0 0.0
    %571 = vmatpush1.msra.mxu0 0.0
    %572 = vmatprep.subr.mxu0 0.0
    %573 = vmatpush1.msra.mxu0 0.0
    %574 = vmatprep.subr.mxu0 0.0
    %575 = vmatpush1.msra.mxu0 0.0
    %576 = vmatprep.subr.mxu0 0.0
    %577 = vmatpush1.msra.mxu0 0.0
    %578 = vmatprep.subr.mxu0 0.0
    %579 = vmatpush1.msra.mxu0 0.0
    %580 = vmatprep.subr.mxu0 0.0
    %581 = vmatpush1.msra.mxu0 0.0
    %582 = vmatprep.subr.mxu0 0.0
    %583 = vmatpush1.msra.mxu0 0.0
    %584 = vmatprep.subr.mxu0 0.0
    %585 = vmatpush1.msra.mxu0 0.0
    %586 = vmatprep.subr.mxu0 0.0
    %587 = vmatpush1.msra.mxu0 0.0
    %588 = vmatprep.subr.mxu0 0.0
    %589 = vmatpush1.msra.mxu0 0.0
    %590 = vmatprep.subr.mxu0 0.0
    %591 = vmatpush1.msra.mxu0 0.0
    %592 = vmatprep.subr.mxu0 0.0
    %593 = vmatpush1.msra.mxu0 0.0
    %594 = vmatprep.subr.mxu0 0.0
    %595 = vmatpush1.msra.mxu0 0.0
    %596 = vmatprep.subr.mxu0 0.0
    %597 = vmatpush1.msra.mxu0 0.0
    %598 = vmatprep.subr.mxu0 0.0
    %599 = vmatpush1.msra.mxu0 0.0
    %600 = vmatprep.subr.mxu0 0.0
    %601 = vmatpush1.msra.mxu0 0.0
    %602 = vmatprep.subr.mxu0 0.0
    %603 = vmatpush1.msra.mxu0 0.0
    %604 = vmatprep.subr.mxu0 0.0
    %605 = vmatpush1.msra.mxu0 0.0
    %606 = vmatprep.subr.mxu0 0.0
    %607 = vmatpush1.msra.mxu0 0.0
    %608 = vmatprep.subr.mxu0 0.0
    %609 = vmatpush1.msra.mxu0 0.0
    %610 = vmatprep.subr.mxu0 0.0
    %611 = vmatpush1.msra.mxu0 0.0
    %612 = vmatprep.subr.mxu0 0.0
    %613 = vmatpush1.msra.mxu0 0.0
    %614 = vmatprep.mubr.f32.mxu0 0.0
    %615 = vmatmul.mubr.f32.gmra.mrb[0].mxu0 %v548
    %v616 = vpop.f32.mrb[0].mxu0
    %v617 = vadd.f32 %v545, %v616
    %v618 = vpop.f32.mrb[0].mxu0
    %v619 = vadd.f32 %v545, %v618
    %620 = vdwg.mxu0
    %621 = vmatprep.subr.mxu0 0.0
    %622 = vmatpush1.msra.mxu0 %v467
    %623 = vmatprep.subr.mxu0 0.0
    %624 = vmatpush1.msra.mxu0 %v477
    %625 = vmatprep.subr.mxu0 0.0
    %626 = vmatpush1.msra.mxu0 %v487
    %627 = vmatprep.subr.mxu0 0.0
    %628 = vmatpush1.msra.mxu0 %v497
    %629 = vmatprep.subr.mxu0 0.0
    %630 = vmatpush1.msra.mxu0 %v302
    %631 = vmatprep.subr.mxu0 0.0
    %632 = vmatpush1.msra.mxu0 %v509
    %633 = vmatprep.subr.mxu0 0.0
    %634 = vmatpush1.msra.mxu0 %v519
    %635 = vmatprep.subr.mxu0 0.0
    %636 = vmatpush1.msra.mxu0 %v529
    %637 = vmatprep.subr.mxu0 0.0
    %638 = vmatpush1.msra.mxu0 %v539
    %639 = vmatprep.subr.mxu0 0.0
    %640 = vmatpush1.msra.mxu0 0.0
    %641 = vmatprep.subr.mxu0 0.0
    %642 = vmatpush1.msra.mxu0 0.0
    %643 = vmatprep.subr.mxu0 0.0
    %644 = vmatpush1.msra.mxu0 0.0
    %645 = vmatprep.subr.mxu0 0.0
    %646 = vmatpush1.msra.mxu0 0.0
    %647 = vmatprep.subr.mxu0 0.0
    %648 = vmatpush1.msra.mxu0 0.0
    %649 = vmatprep.subr.mxu0 0.0
    %650 = vmatpush1.msra.mxu0 0.0
    %651 = vmatprep.subr.mxu0 0.0
    %652 = vmatpush1.msra.mxu0 0.0
    %653 = vmatprep.subr.mxu0 0.0
    %654 = vmatpush1.msra.mxu0 0.0
    %655 = vmatprep.subr.mxu0 0.0
    %656 = vmatpush1.msra.mxu0 0.0
    %657 = vmatprep.subr.mxu0 0.0
    %658 = vmatpush1.msra.mxu0 0.0
    %659 = vmatprep.subr.mxu0 0.0
    %660 = vmatpush1.msra.mxu0 0.0
    %661 = vmatprep.subr.mxu0 0.0
    %662 = vmatpush1.msra.mxu0 0.0
    %663 = vmatprep.subr.mxu0 0.0
    %664 = vmatpush1.msra.mxu0 0.0
    %665 = vmatprep.subr.mxu0 0.0
    %666 = vmatpush1.msra.mxu0 0.0
    %667 = vmatprep.subr.mxu0 0.0
    %668 = vmatpush1.msra.mxu0 0.0
    %669 = vmatprep.subr.mxu0 0.0
    %670 = vmatpush1.msra.mxu0 0.0
    %671 = vmatprep.subr.mxu0 0.0
    %672 = vmatpush1.msra.mxu0 0.0
    %673 = vmatprep.subr.mxu0 0.0
    %674 = vmatpush1.msra.mxu0 0.0
    %675 = vmatprep.subr.mxu0 0.0
    %676 = vmatpush1.msra.mxu0 0.0
    %677 = vmatprep.subr.mxu0 0.0
    %678 = vmatpush1.msra.mxu0 0.0
    %679 = vmatprep.subr.mxu0 0.0
    %680 = vmatpush1.msra.mxu0 0.0
    %681 = vmatprep.subr.mxu0 0.0
    %682 = vmatpush1.msra.mxu0 0.0
    %683 = vmatprep.subr.mxu0 0.0
    %684 = vmatpush1.msra.mxu0 0.0
    %685 = vmatprep.mubr.f32.mxu0 0.0
    %686 = vmatmul.mubr.f32.gmra.mrb[0].mxu0 %v548
    %v687 = vpop.f32.mrb[0].mxu0
    %v688 = vadd.f32 %v545, %v687
    %v689 = vpop.f32.mrb[0].mxu0
    %690 = vdwg.mxu0
    %v691 = vadd.f32 %v617, %v384
    %v692 = vadd.f32 %v619, %v386
    %v693 = vadd.f32 %v688, %v455
    %vm694 = vcmp.ge.f32.partialorder %v691, 0.0
    %vm695 = vcmp.ge.f32.partialorder %v692, 0.0
    %vm696 = vcmp.ge.f32.partialorder %v693, 0.0
    %v697 = vmul.f32 %v691, 0.01
    %v698 = vmul.f32 %v692, 0.01
    %v699 = vmul.f32 %v693, 0.01
    %v700 = vsel %vm694, %v691, %v697
    %v701 = vsel %vm695, %v692, %v698
    %v702 = vsel %vm696, %v693, %v699
    %v703 = vmul.f32 %v700, %v288
    %v704 = vmul.f32 %v701, %v292
    %v705 = vmul.f32 %v702, %v296
    %v706 = vld [vmem:[%s9] sm:$0xff]
    %v707 = vld [vmem:[%s10] sm:$0xff]
    %709 = vset.pattern.permute.xlu0 0
    %710 = vperm.xlu0 %709, %v707
    %v711 = vpop.permute.xlu0 %710
    %v714 = vsel %vm313, %v706, 0
    %716 = vmatprep.subr.mxu0 %v704
    %717 = vmatpush1.msra.mxu0 %v703
    %718 = vmatprep.subr.mxu0 0.0
    %719 = vmatpush1.msra.mxu0 0.0
    %720 = vmatprep.subr.mxu0 0.0
    %721 = vmatpush1.msra.mxu0 0.0
    %722 = vmatprep.subr.mxu0 0.0
    %723 = vmatpush1.msra.mxu0 0.0
    %724 = vmatprep.subr.mxu0 0.0
    %725 = vmatpush1.msra.mxu0 0.0
    %726 = vmatprep.subr.mxu0 0.0
    %727 = vmatpush1.msra.mxu0 0.0
    %728 = vmatprep.subr.mxu0 0.0
    %729 = vmatpush1.msra.mxu0 0.0
    %730 = vmatprep.subr.mxu0 0.0
    %731 = vmatpush1.msra.mxu0 0.0
    %732 = vmatprep.subr.mxu0 0.0
    %733 = vmatpush1.msra.mxu0 0.0
    %734 = vmatprep.subr.mxu0 0.0
    %735 = vmatpush1.msra.mxu0 0.0
    %736 = vmatprep.subr.mxu0 0.0
    %737 = vmatpush1.msra.mxu0 0.0
    %738 = vmatprep.subr.mxu0 0.0
    %739 = vmatpush1.msra.mxu0 0.0
    %740 = vmatprep.subr.mxu0 0.0
    %741 = vmatpush1.msra.mxu0 0.0
    %742 = vmatprep.subr.mxu0 0.0
    %743 = vmatpush1.msra.mxu0 0.0
    %744 = vmatprep.subr.mxu0 0.0
    %745 = vmatpush1.msra.mxu0 0.0
    %746 = vmatprep.subr.mxu0 0.0
    %747 = vmatpush1.msra.mxu0 0.0
    %748 = vmatprep.subr.mxu0 0.0
    %749 = vmatpush1.msra.mxu0 0.0
    %750 = vmatprep.subr.mxu0 0.0
    %751 = vmatpush1.msra.mxu0 0.0
    %752 = vmatprep.subr.mxu0 0.0
    %753 = vmatpush1.msra.mxu0 0.0
    %754 = vmatprep.subr.mxu0 0.0
    %755 = vmatpush1.msra.mxu0 0.0
    %756 = vmatprep.subr.mxu0 0.0
    %757 = vmatpush1.msra.mxu0 0.0
    %758 = vmatprep.subr.mxu0 0.0
    %759 = vmatpush1.msra.mxu0 0.0
    %760 = vmatprep.subr.mxu0 0.0
    %761 = vmatpush1.msra.mxu0 0.0
    %762 = vmatprep.subr.mxu0 0.0
    %763 = vmatpush1.msra.mxu0 0.0
    %764 = vmatprep.subr.mxu0 0.0
    %765 = vmatpush1.msra.mxu0 0.0
    %766 = vmatprep.subr.mxu0 0.0
    %767 = vmatpush1.msra.mxu0 0.0
    %768 = vmatprep.subr.mxu0 0.0
    %769 = vmatpush1.msra.mxu0 0.0
    %770 = vmatprep.subr.mxu0 0.0
    %771 = vmatpush1.msra.mxu0 0.0
    %772 = vmatprep.subr.mxu0 0.0
    %773 = vmatpush1.msra.mxu0 0.0
    %774 = vmatprep.subr.mxu0 0.0
    %775 = vmatpush1.msra.mxu0 0.0
    %776 = vmatprep.subr.mxu0 0.0
    %777 = vmatpush1.msra.mxu0 0.0
    %778 = vmatprep.subr.mxu0 0.0
    %779 = vmatpush1.msra.mxu0 0.0
    %780 = vmatprep.mubr.f32.mxu0 0.0
    %781 = vmatmul.mubr.f32.gmra.mrb[0].mxu0 %v714
    %v782 = vpop.f32.mrb[0].mxu0
    %v783 = vadd.f32 %v711, %v782
    %v784 = vpop.f32.mrb[0].mxu0
    %v785 = vadd.f32 %v711, %v784
    %786 = vdwg.mxu0
    %787 = vmatprep.subr.mxu0 0.0
    %788 = vmatpush1.msra.mxu0 %v705
    %789 = vmatprep.subr.mxu0 0.0
    %790 = vmatpush1.msra.mxu0 0.0
    %791 = vmatprep.subr.mxu0 0.0
    %792 = vmatpush1.msra.mxu0 0.0
    %793 = vmatprep.subr.mxu0 0.0
    %794 = vmatpush1.msra.mxu0 0.0
    %795 = vmatprep.subr.mxu0 0.0
    %796 = vmatpush1.msra.mxu0 0.0
    %797 = vmatprep.subr.mxu0 0.0
    %798 = vmatpush1.msra.mxu0 0.0
    %799 = vmatprep.subr.mxu0 0.0
    %800 = vmatpush1.msra.mxu0 0.0
    %801 = vmatprep.subr.mxu0 0.0
    %802 = vmatpush1.msra.mxu0 0.0
    %803 = vmatprep.subr.mxu0 0.0
    %804 = vmatpush1.msra.mxu0 0.0
    %805 = vmatprep.subr.mxu0 0.0
    %806 = vmatpush1.msra.mxu0 0.0
    %807 = vmatprep.subr.mxu0 0.0
    %808 = vmatpush1.msra.mxu0 0.0
    %809 = vmatprep.subr.mxu0 0.0
    %810 = vmatpush1.msra.mxu0 0.0
    %811 = vmatprep.subr.mxu0 0.0
    %812 = vmatpush1.msra.mxu0 0.0
    %813 = vmatprep.subr.mxu0 0.0
    %814 = vmatpush1.msra.mxu0 0.0
    %815 = vmatprep.subr.mxu0 0.0
    %816 = vmatpush1.msra.mxu0 0.0
    %817 = vmatprep.subr.mxu0 0.0
    %818 = vmatpush1.msra.mxu0 0.0
    %819 = vmatprep.subr.mxu0 0.0
    %820 = vmatpush1.msra.mxu0 0.0
    %821 = vmatprep.subr.mxu0 0.0
    %822 = vmatpush1.msra.mxu0 0.0
    %823 = vmatprep.subr.mxu0 0.0
    %824 = vmatpush1.msra.mxu0 0.0
    %825 = vmatprep.subr.mxu0 0.0
    %826 = vmatpush1.msra.mxu0 0.0
    %827 = vmatprep.subr.mxu0 0.0
    %828 = vmatpush1.msra.mxu0 0.0
    %829 = vmatprep.subr.mxu0 0.0
    %830 = vmatpush1.msra.mxu0 0.0
    %831 = vmatprep.subr.mxu0 0.0
    %832 = vmatpush1.msra.mxu0 0.0
    %833 = vmatprep.subr.mxu0 0.0
    %834 = vmatpush1.msra.mxu0 0.0
    %835 = vmatprep.subr.mxu0 0.0
    %836 = vmatpush1.msra.mxu0 0.0
    %837 = vmatprep.subr.mxu0 0.0
    %838 = vmatpush1.msra.mxu0 0.0
    %839 = vmatprep.subr.mxu0 0.0
    %840 = vmatpush1.msra.mxu0 0.0
    %841 = vmatprep.subr.mxu0 0.0
    %842 = vmatpush1.msra.mxu0 0.0
    %843 = vmatprep.subr.mxu0 0.0
    %844 = vmatpush1.msra.mxu0 0.0
    %845 = vmatprep.subr.mxu0 0.0
    %846 = vmatpush1.msra.mxu0 0.0
    %847 = vmatprep.subr.mxu0 0.0
    %848 = vmatpush1.msra.mxu0 0.0
    %849 = vmatprep.subr.mxu0 0.0
    %850 = vmatpush1.msra.mxu0 0.0
    %851 = vmatprep.mubr.f32.mxu0 0.0
    %852 = vmatmul.mubr.f32.gmra.mrb[0].mxu0 %v714
    %v853 = vpop.f32.mrb[0].mxu0
    %v854 = vadd.f32 %v711, %v853
    %v855 = vpop.f32.mrb[0].mxu0
    %856 = vdwg.mxu0
    %vm857 = vcmp.ge.f32.partialorder %v783, 0.0
    %vm858 = vcmp.ge.f32.partialorder %v785, 0.0
    %vm859 = vcmp.ge.f32.partialorder %v854, 0.0
    %v860 = vmul.f32 %v783, 0.01
    %v861 = vmul.f32 %v785, 0.01
    %v862 = vmul.f32 %v854, 0.01
    %v863 = vsel %vm857, %v783, %v860
    %v864 = vsel %vm858, %v785, %v861
    %v865 = vsel %vm859, %v854, %v862
    %v866 = vmul.f32 %v863, %v288
    %v867 = vmul.f32 %v864, %v292
    %v868 = vmul.f32 %v865, %v296
    %869 = vrot.lane.b32.xlu0 %v866, 17
    %v870 = vpop.permute.xlu0 %869
    %871 = vrot.lane.b32.xlu0 %v867, 17
    %v872 = vpop.permute.xlu0 %871
    %873 = vrot.lane.b32.xlu0 %v868, 17
    %v874 = vpop.permute.xlu0 %873
    %v875 = vsel %vm466, %v872, %v874
    %v876 = vsel %vm466, %v870, %v872
    %v877 = vsel %vm466, %v874, %v870
    %878 = vrot.lane.b32.xlu0 %v866, 16
    %v879 = vpop.permute.xlu0 %878
    %880 = vrot.lane.b32.xlu0 %v867, 16
    %v881 = vpop.permute.xlu0 %880
    %882 = vrot.lane.b32.xlu0 %v868, 16
    %v883 = vpop.permute.xlu0 %882
    %v884 = vsel %vm476, %v881, %v883
    %v885 = vsel %vm476, %v879, %v881
    %v886 = vsel %vm476, %v883, %v879
    %887 = vrot.lane.b32.xlu0 %v866, 15
    %v888 = vpop.permute.xlu0 %887
    %889 = vrot.lane.b32.xlu0 %v867, 15
    %v890 = vpop.permute.xlu0 %889
    %891 = vrot.lane.b32.xlu0 %v868, 15
    %v892 = vpop.permute.xlu0 %891
    %v893 = vsel %vm486, %v890, %v892
    %v894 = vsel %vm486, %v888, %v890
    %v895 = vsel %vm486, %v892, %v888
    %896 = vrot.lane.b32.xlu0 %v866, 1
    %v897 = vpop.permute.xlu0 %896
    %898 = vrot.lane.b32.xlu0 %v867, 1
    %v899 = vpop.permute.xlu0 %898
    %900 = vrot.lane.b32.xlu0 %v868, 1
    %v901 = vpop.permute.xlu0 %900
    %v902 = vsel %vm496, %v899, %v901
    %v903 = vsel %vm496, %v897, %v899
    %v904 = vsel %vm496, %v901, %v897
    %905 = vrot.lane.b32.xlu0 %v866, 127
    %v906 = vpop.permute.xlu0 %905
    %907 = vrot.lane.b32.xlu0 %v867, 127
    %v908 = vpop.permute.xlu0 %907
    %909 = vrot.lane.b32.xlu0 %v868, 127
    %v910 = vpop.permute.xlu0 %909
    %v911 = vsel %vm506, %v908, %v910
    %v912 = vsel %vm506, %v906, %v908
    %v913 = vsel %vm506, %v910, %v906
    %914 = vrot.lane.b32.xlu0 %v866, 113
    %v915 = vpop.permute.xlu0 %914
    %916 = vrot.lane.b32.xlu0 %v867, 113
    %v917 = vpop.permute.xlu0 %916
    %918 = vrot.lane.b32.xlu0 %v868, 113
    %v919 = vpop.permute.xlu0 %918
    %v920 = vsel %vm516, %v917, %v919
    %v921 = vsel %vm516, %v915, %v917
    %v922 = vsel %vm516, %v919, %v915
    %923 = vrot.lane.b32.xlu0 %v866, 112
    %v924 = vpop.permute.xlu0 %923
    %925 = vrot.lane.b32.xlu0 %v867, 112
    %v926 = vpop.permute.xlu0 %925
    %927 = vrot.lane.b32.xlu0 %v868, 112
    %v928 = vpop.permute.xlu0 %927
    %v929 = vsel %vm526, %v926, %v928
    %v930 = vsel %vm526, %v924, %v926
    %v931 = vsel %vm526, %v928, %v924
    %932 = vrot.lane.b32.xlu0 %v866, 111
    %v933 = vpop.permute.xlu0 %932
    %934 = vrot.lane.b32.xlu0 %v867, 111
    %v935 = vpop.permute.xlu0 %934
    %936 = vrot.lane.b32.xlu0 %v868, 111
    %v937 = vpop.permute.xlu0 %936
    %v938 = vsel %vm536, %v935, %v937
    %v939 = vsel %vm536, %v933, %v935
    %v940 = vsel %vm536, %v937, %v933
    %v941 = vld [vmem:[%s11] sm:$0xff]
    %v942 = vld [vmem:[%s12] sm:$0xff]
    %944 = vset.pattern.permute.xlu0 0
    %945 = vperm.xlu0 %944, %v942
    %v946 = vpop.permute.xlu0 %945
    %v949 = vsel %vm130, %v941, 0
    %951 = vmatprep.subr.mxu0 %v876
    %952 = vmatpush1.msra.mxu0 %v877
    %953 = vmatprep.subr.mxu0 %v885
    %954 = vmatpush1.msra.mxu0 %v886
    %955 = vmatprep.subr.mxu0 %v894
    %956 = vmatpush1.msra.mxu0 %v895
    %957 = vmatprep.subr.mxu0 %v903
    %958 = vmatpush1.msra.mxu0 %v904
    %959 = vmatprep.subr.mxu0 %v867
    %960 = vmatpush1.msra.mxu0 %v866
    %961 = vmatprep.subr.mxu0 %v911
    %962 = vmatpush1.msra.mxu0 %v912
    %963 = vmatprep.subr.mxu0 %v920
    %964 = vmatpush1.msra.mxu0 %v921
    %965 = vmatprep.subr.mxu0 %v929
    %966 = vmatpush1.msra.mxu0 %v930
    %967 = vmatprep.subr.mxu0 %v938
    %968 = vmatpush1.msra.mxu0 %v939
    %969 = vmatprep.subr.mxu0 0.0
    %970 = vmatpush1.msra.mxu0 0.0
    %971 = vmatprep.subr.mxu0 0.0
    %972 = vmatpush1.msra.mxu0 0.0
    %973 = vmatprep.subr.mxu0 0.0
    %974 = vmatpush1.msra.mxu0 0.0
    %975 = vmatprep.subr.mxu0 0.0
    %976 = vmatpush1.msra.mxu0 0.0
    %977 = vmatprep.subr.mxu0 0.0
    %978 = vmatpush1.msra.mxu0 0.0
    %979 = vmatprep.subr.mxu0 0.0
    %980 = vmatpush1.msra.mxu0 0.0
    %981 = vmatprep.subr.mxu0 0.0
    %982 = vmatpush1.msra.mxu0 0.0
    %983 = vmatprep.subr.mxu0 0.0
    %984 = vmatpush1.msra.mxu0 0.0
    %985 = vmatprep.subr.mxu0 0.0
    %986 = vmatpush1.msra.mxu0 0.0
    %987 = vmatprep.subr.mxu0 0.0
    %988 = vmatpush1.msra.mxu0 0.0
    %989 = vmatprep.subr.mxu0 0.0
    %990 = vmatpush1.msra.mxu0 0.0
    %991 = vmatprep.subr.mxu0 0.0
    %992 = vmatpush1.msra.mxu0 0.0
    %993 = vmatprep.subr.mxu0 0.0
    %994 = vmatpush1.msra.mxu0 0.0
    %995 = vmatprep.subr.mxu0 0.0
    %996 = vmatpush1.msra.mxu0 0.0
    %997 = vmatprep.subr.mxu0 0.0
    %998 = vmatpush1.msra.mxu0 0.0
    %999 = vmatprep.subr.mxu0 0.0
    %1000 = vmatpush1.msra.mxu0 0.0
    %1001 = vmatprep.subr.mxu0 0.0
    %1002 = vmatpush1.msra.mxu0 0.0
    %1003 = vmatprep.subr.mxu0 0.0
    %1004 = vmatpush1.msra.mxu0 0.0
    %1005 = vmatprep.subr.mxu0 0.0
    %1006 = vmatpush1.msra.mxu0 0.0
    %1007 = vmatprep.subr.mxu0 0.0
    %1008 = vmatpush1.msra.mxu0 0.0
    %1009 = vmatprep.subr.mxu0 0.0
    %1010 = vmatpush1.msra.mxu0 0.0
    %1011 = vmatprep.subr.mxu0 0.0
    %1012 = vmatpush1.msra.mxu0 0.0
    %1013 = vmatprep.subr.mxu0 0.0
    %1014 = vmatpush1.msra.mxu0 0.0
    %1015 = vmatprep.mubr.f32.mxu0 0.0
    %1016 = vmatmul.mubr.f32.gmra.mrb[0].mxu0 %v949
    %v1017 = vpop.f32.mrb[0].mxu0
    %v1018 = vadd.f32 %v946, %v1017
    %v1019 = vpop.f32.mrb[0].mxu0
    %v1020 = vadd.f32 %v946, %v1019
    %1021 = vdwg.mxu0
    %1022 = vmatprep.subr.mxu0 0.0
    %1023 = vmatpush1.msra.mxu0 %v875
    %1024 = vmatprep.subr.mxu0 0.0
    %1025 = vmatpush1.msra.mxu0 %v884
    %1026 = vmatprep.subr.mxu0 0.0
    %1027 = vmatpush1.msra.mxu0 %v893
    %1028 = vmatprep.subr.mxu0 0.0
    %1029 = vmatpush1.msra.mxu0 %v902
    %1030 = vmatprep.subr.mxu0 0.0
    %1031 = vmatpush1.msra.mxu0 %v868
    %1032 = vmatprep.subr.mxu0 0.0
    %1033 = vmatpush1.msra.mxu0 %v913
    %1034 = vmatprep.subr.mxu0 0.0
    %1035 = vmatpush1.msra.mxu0 %v922
    %1036 = vmatprep.subr.mxu0 0.0
    %1037 = vmatpush1.msra.mxu0 %v931
    %1038 = vmatprep.subr.mxu0 0.0
    %1039 = vmatpush1.msra.mxu0 %v940
    %1040 = vmatprep.subr.mxu0 0.0
    %1041 = vmatpush1.msra.mxu0 0.0
    %1042 = vmatprep.subr.mxu0 0.0
    %1043 = vmatpush1.msra.mxu0 0.0
    %1044 = vmatprep.subr.mxu0 0.0
    %1045 = vmatpush1.msra.mxu0 0.0
    %1046 = vmatprep.subr.mxu0 0.0
    %1047 = vmatpush1.msra.mxu0 0.0
    %1048 = vmatprep.subr.mxu0 0.0
    %1049 = vmatpush1.msra.mxu0 0.0
    %1050 = vmatprep.subr.mxu0 0.0
    %1051 = vmatpush1.msra.mxu0 0.0
    %1052 = vmatprep.subr.mxu0 0.0
    %1053 = vmatpush1.msra.mxu0 0.0
    %1054 = vmatprep.subr.mxu0 0.0
    %1055 = vmatpush1.msra.mxu0 0.0
    %1056 = vmatprep.subr.mxu0 0.0
    %1057 = vmatpush1.msra.mxu0 0.0
    %1058 = vmatprep.subr.mxu0 0.0
    %1059 = vmatpush1.msra.mxu0 0.0
    %1060 = vmatprep.subr.mxu0 0.0
    %1061 = vmatpush1.msra.mxu0 0.0
    %1062 = vmatprep.subr.mxu0 0.0
    %1063 = vmatpush1.msra.mxu0 0.0
    %1064 = vmatprep.subr.mxu0 0.0
    %1065 = vmatpush1.msra.mxu0 0.0
    %1066 = vmatprep.subr.mxu0 0.0
    %1067 = vmatpush1.msra.mxu0 0.0
    %1068 = vmatprep.subr.mxu0 0.0
    %1069 = vmatpush1.msra.mxu0 0.0
    %1070 = vmatprep.subr.mxu0 0.0
    %1071 = vmatpush1.msra.mxu0 0.0
    %1072 = vmatprep.subr.mxu0 0.0
    %1073 = vmatpush1.msra.mxu0 0.0
    %1074 = vmatprep.subr.mxu0 0.0
    %1075 = vmatpush1.msra.mxu0 0.0
    %1076 = vmatprep.subr.mxu0 0.0
    %1077 = vmatpush1.msra.mxu0 0.0
    %1078 = vmatprep.subr.mxu0 0.0
    %1079 = vmatpush1.msra.mxu0 0.0
    %1080 = vmatprep.subr.mxu0 0.0
    %1081 = vmatpush1.msra.mxu0 0.0
    %1082 = vmatprep.subr.mxu0 0.0
    %1083 = vmatpush1.msra.mxu0 0.0
    %1084 = vmatprep.subr.mxu0 0.0
    %1085 = vmatpush1.msra.mxu0 0.0
    %1086 = vmatprep.mubr.f32.mxu0 0.0
    %1087 = vmatmul.mubr.f32.gmra.mrb[0].mxu0 %v949
    %v1088 = vpop.f32.mrb[0].mxu0
    %v1089 = vadd.f32 %v946, %v1088
    %v1090 = vpop.f32.mrb[0].mxu0
    %1091 = vdwg.mxu0
    %vm1092 = vcmp.ge.f32.partialorder %v1018, 0.0
    %vm1093 = vcmp.ge.f32.partialorder %v1020, 0.0
    %vm1094 = vcmp.ge.f32.partialorder %v1089, 0.0
    %v1095 = vmul.f32 %v1018, 0.01
    %v1096 = vmul.f32 %v1020, 0.01
    %v1097 = vmul.f32 %v1089, 0.01
    %v1098 = vsel %vm1092, %v1018, %v1095
    %v1099 = vsel %vm1093, %v1020, %v1096
    %v1100 = vsel %vm1094, %v1089, %v1097
    %v1101 = vmul.f32 %v1098, %v288
    %v1102 = vmul.f32 %v1099, %v292
    %v1103 = vmul.f32 %v1100, %v296
    %v1104 = vld [vmem:[%s13] sm:$0xff]
    %v1105 = vld [vmem:[%s14] sm:$0xff]
    %1107 = vset.pattern.permute.xlu0 0
    %1108 = vperm.xlu0 %1107, %v1105
    %v1109 = vpop.permute.xlu0 %1108
    %v1112 = vsel %vm313, %v1104, 0
    %1114 = vmatprep.subr.mxu0 %v1102
    %1115 = vmatpush1.msra.mxu0 %v1101
    %1116 = vmatprep.subr.mxu0 0.0
    %1117 = vmatpush1.msra.mxu0 0.0
    %1118 = vmatprep.subr.mxu0 0.0
    %1119 = vmatpush1.msra.mxu0 0.0
    %1120 = vmatprep.subr.mxu0 0.0
    %1121 = vmatpush1.msra.mxu0 0.0
    %1122 = vmatprep.subr.mxu0 0.0
    %1123 = vmatpush1.msra.mxu0 0.0
    %1124 = vmatprep.subr.mxu0 0.0
    %1125 = vmatpush1.msra.mxu0 0.0
    %1126 = vmatprep.subr.mxu0 0.0
    %1127 = vmatpush1.msra.mxu0 0.0
    %1128 = vmatprep.subr.mxu0 0.0
    %1129 = vmatpush1.msra.mxu0 0.0
    %1130 = vmatprep.subr.mxu0 0.0
    %1131 = vmatpush1.msra.mxu0 0.0
    %1132 = vmatprep.subr.mxu0 0.0
    %1133 = vmatpush1.msra.mxu0 0.0
    %1134 = vmatprep.subr.mxu0 0.0
    %1135 = vmatpush1.msra.mxu0 0.0
    %1136 = vmatprep.subr.mxu0 0.0
    %1137 = vmatpush1.msra.mxu0 0.0
    %1138 = vmatprep.subr.mxu0 0.0
    %1139 = vmatpush1.msra.mxu0 0.0
    %1140 = vmatprep.subr.mxu0 0.0
    %1141 = vmatpush1.msra.mxu0 0.0
    %1142 = vmatprep.subr.mxu0 0.0
    %1143 = vmatpush1.msra.mxu0 0.0
    %1144 = vmatprep.subr.mxu0 0.0
    %1145 = vmatpush1.msra.mxu0 0.0
    %1146 = vmatprep.subr.mxu0 0.0
    %1147 = vmatpush1.msra.mxu0 0.0
    %1148 = vmatprep.subr.mxu0 0.0
    %1149 = vmatpush1.msra.mxu0 0.0
    %1150 = vmatprep.subr.mxu0 0.0
    %1151 = vmatpush1.msra.mxu0 0.0
    %1152 = vmatprep.subr.mxu0 0.0
    %1153 = vmatpush1.msra.mxu0 0.0
    %1154 = vmatprep.subr.mxu0 0.0
    %1155 = vmatpush1.msra.mxu0 0.0
    %1156 = vmatprep.subr.mxu0 0.0
    %1157 = vmatpush1.msra.mxu0 0.0
    %1158 = vmatprep.subr.mxu0 0.0
    %1159 = vmatpush1.msra.mxu0 0.0
    %1160 = vmatprep.subr.mxu0 0.0
    %1161 = vmatpush1.msra.mxu0 0.0
    %1162 = vmatprep.subr.mxu0 0.0
    %1163 = vmatpush1.msra.mxu0 0.0
    %1164 = vmatprep.subr.mxu0 0.0
    %1165 = vmatpush1.msra.mxu0 0.0
    %1166 = vmatprep.subr.mxu0 0.0
    %1167 = vmatpush1.msra.mxu0 0.0
    %1168 = vmatprep.subr.mxu0 0.0
    %1169 = vmatpush1.msra.mxu0 0.0
    %1170 = vmatprep.subr.mxu0 0.0
    %1171 = vmatpush1.msra.mxu0 0.0
    %1172 = vmatprep.subr.mxu0 0.0
    %1173 = vmatpush1.msra.mxu0 0.0
    %1174 = vmatprep.subr.mxu0 0.0
    %1175 = vmatpush1.msra.mxu0 0.0
    %1176 = vmatprep.subr.mxu0 0.0
    %1177 = vmatpush1.msra.mxu0 0.0
    %1178 = vmatprep.mubr.f32.mxu0 0.0
    %1179 = vmatmul.mubr.f32.gmra.mrb[0].mxu0 %v1112
    %v1180 = vpop.f32.mrb[0].mxu0
    %v1181 = vadd.f32 %v1109, %v1180
    %v1182 = vpop.f32.mrb[0].mxu0
    %v1183 = vadd.f32 %v1109, %v1182
    %1184 = vdwg.mxu0
    %1185 = vmatprep.subr.mxu0 0.0
    %1186 = vmatpush1.msra.mxu0 %v1103
    %1187 = vmatprep.subr.mxu0 0.0
    %1188 = vmatpush1.msra.mxu0 0.0
    %1189 = vmatprep.subr.mxu0 0.0
    %1190 = vmatpush1.msra.mxu0 0.0
    %1191 = vmatprep.subr.mxu0 0.0
    %1192 = vmatpush1.msra.mxu0 0.0
    %1193 = vmatprep.subr.mxu0 0.0
    %1194 = vmatpush1.msra.mxu0 0.0
    %1195 = vmatprep.subr.mxu0 0.0
    %1196 = vmatpush1.msra.mxu0 0.0
    %1197 = vmatprep.subr.mxu0 0.0
    %1198 = vmatpush1.msra.mxu0 0.0
    %1199 = vmatprep.subr.mxu0 0.0
    %1200 = vmatpush1.msra.mxu0 0.0
    %1201 = vmatprep.subr.mxu0 0.0
    %1202 = vmatpush1.msra.mxu0 0.0
    %1203 = vmatprep.subr.mxu0 0.0
    %1204 = vmatpush1.msra.mxu0 0.0
    %1205 = vmatprep.subr.mxu0 0.0
    %1206 = vmatpush1.msra.mxu0 0.0
    %1207 = vmatprep.subr.mxu0 0.0
    %1208 = vmatpush1.msra.mxu0 0.0
    %1209 = vmatprep.subr.mxu0 0.0
    %1210 = vmatpush1.msra.mxu0 0.0
    %1211 = vmatprep.subr.mxu0 0.0
    %1212 = vmatpush1.msra.mxu0 0.0
    %1213 = vmatprep.subr.mxu0 0.0
    %1214 = vmatpush1.msra.mxu0 0.0
    %1215 = vmatprep.subr.mxu0 0.0
    %1216 = vmatpush1.msra.mxu0 0.0
    %1217 = vmatprep.subr.mxu0 0.0
    %1218 = vmatpush1.msra.mxu0 0.0
    %1219 = vmatprep.subr.mxu0 0.0
    %1220 = vmatpush1.msra.mxu0 0.0
    %1221 = vmatprep.subr.mxu0 0.0
    %1222 = vmatpush1.msra.mxu0 0.0
    %1223 = vmatprep.subr.mxu0 0.0
    %1224 = vmatpush1.msra.mxu0 0.0
    %1225 = vmatprep.subr.mxu0 0.0
    %1226 = vmatpush1.msra.mxu0 0.0
    %1227 = vmatprep.subr.mxu0 0.0
    %1228 = vmatpush1.msra.mxu0 0.0
    %1229 = vmatprep.subr.mxu0 0.0
    %1230 = vmatpush1.msra.mxu0 0.0
    %1231 = vmatprep.subr.mxu0 0.0
    %1232 = vmatpush1.msra.mxu0 0.0
    %1233 = vmatprep.subr.mxu0 0.0
    %1234 = vmatpush1.msra.mxu0 0.0
    %1235 = vmatprep.subr.mxu0 0.0
    %1236 = vmatpush1.msra.mxu0 0.0
    %1237 = vmatprep.subr.mxu0 0.0
    %1238 = vmatpush1.msra.mxu0 0.0
    %1239 = vmatprep.subr.mxu0 0.0
    %1240 = vmatpush1.msra.mxu0 0.0
    %1241 = vmatprep.subr.mxu0 0.0
    %1242 = vmatpush1.msra.mxu0 0.0
    %1243 = vmatprep.subr.mxu0 0.0
    %1244 = vmatpush1.msra.mxu0 0.0
    %1245 = vmatprep.subr.mxu0 0.0
    %1246 = vmatpush1.msra.mxu0 0.0
    %1247 = vmatprep.subr.mxu0 0.0
    %1248 = vmatpush1.msra.mxu0 0.0
    %1249 = vmatprep.mubr.f32.mxu0 0.0
    %1250 = vmatmul.mubr.f32.gmra.mrb[0].mxu0 %v1112
    %v1251 = vpop.f32.mrb[0].mxu0
    %v1252 = vadd.f32 %v1109, %v1251
    %v1253 = vpop.f32.mrb[0].mxu0
    %1254 = vdwg.mxu0
    %v1255 = vadd.f32 %v1181, %v703
    %v1256 = vadd.f32 %v1183, %v704
    %v1257 = vadd.f32 %v1252, %v705
    %vm1258 = vcmp.ge.f32.partialorder %v1255, 0.0
    %vm1259 = vcmp.ge.f32.partialorder %v1256, 0.0
    %vm1260 = vcmp.ge.f32.partialorder %v1257, 0.0
    %v1261 = vmul.f32 %v1255, 0.01
    %v1262 = vmul.f32 %v1256, 0.01
    %v1263 = vmul.f32 %v1257, 0.01
    %v1264 = vsel %vm1258, %v1255, %v1261
    %v1265 = vsel %vm1259, %v1256, %v1262
    %v1266 = vsel %vm1260, %v1257, %v1263
    %v1267 = vmul.f32 %v1264, %v288
    %v1268 = vmul.f32 %v1265, %v292
    %v1269 = vmul.f32 %v1266, %v296
    %v1270 = vld [vmem:[%s15] sm:$0xff]
    %v1271 = vld [vmem:[%s16] sm:$0xff]
    %1273 = vset.pattern.permute.xlu0 0
    %1274 = vperm.xlu0 %1273, %v1271
    %v1275 = vpop.permute.xlu0 %1274
    %v1278 = vsel %vm313, %v1270, 0
    %1280 = vmatprep.subr.mxu0 %v1268
    %1281 = vmatpush1.msra.mxu0 %v1267
    %1282 = vmatprep.subr.mxu0 0.0
    %1283 = vmatpush1.msra.mxu0 0.0
    %1284 = vmatprep.subr.mxu0 0.0
    %1285 = vmatpush1.msra.mxu0 0.0
    %1286 = vmatprep.subr.mxu0 0.0
    %1287 = vmatpush1.msra.mxu0 0.0
    %1288 = vmatprep.subr.mxu0 0.0
    %1289 = vmatpush1.msra.mxu0 0.0
    %1290 = vmatprep.subr.mxu0 0.0
    %1291 = vmatpush1.msra.mxu0 0.0
    %1292 = vmatprep.subr.mxu0 0.0
    %1293 = vmatpush1.msra.mxu0 0.0
    %1294 = vmatprep.subr.mxu0 0.0
    %1295 = vmatpush1.msra.mxu0 0.0
    %1296 = vmatprep.subr.mxu0 0.0
    %1297 = vmatpush1.msra.mxu0 0.0
    %1298 = vmatprep.subr.mxu0 0.0
    %1299 = vmatpush1.msra.mxu0 0.0
    %1300 = vmatprep.subr.mxu0 0.0
    %1301 = vmatpush1.msra.mxu0 0.0
    %1302 = vmatprep.subr.mxu0 0.0
    %1303 = vmatpush1.msra.mxu0 0.0
    %1304 = vmatprep.subr.mxu0 0.0
    %1305 = vmatpush1.msra.mxu0 0.0
    %1306 = vmatprep.subr.mxu0 0.0
    %1307 = vmatpush1.msra.mxu0 0.0
    %1308 = vmatprep.subr.mxu0 0.0
    %1309 = vmatpush1.msra.mxu0 0.0
    %1310 = vmatprep.subr.mxu0 0.0
    %1311 = vmatpush1.msra.mxu0 0.0
    %1312 = vmatprep.subr.mxu0 0.0
    %1313 = vmatpush1.msra.mxu0 0.0
    %1314 = vmatprep.subr.mxu0 0.0
    %1315 = vmatpush1.msra.mxu0 0.0
    %1316 = vmatprep.subr.mxu0 0.0
    %1317 = vmatpush1.msra.mxu0 0.0
    %1318 = vmatprep.subr.mxu0 0.0
    %1319 = vmatpush1.msra.mxu0 0.0
    %1320 = vmatprep.subr.mxu0 0.0
    %1321 = vmatpush1.msra.mxu0 0.0
    %1322 = vmatprep.subr.mxu0 0.0
    %1323 = vmatpush1.msra.mxu0 0.0
    %1324 = vmatprep.subr.mxu0 0.0
    %1325 = vmatpush1.msra.mxu0 0.0
    %1326 = vmatprep.subr.mxu0 0.0
    %1327 = vmatpush1.msra.mxu0 0.0
    %1328 = vmatprep.subr.mxu0 0.0
    %1329 = vmatpush1.msra.mxu0 0.0
    %1330 = vmatprep.subr.mxu0 0.0
    %1331 = vmatpush1.msra.mxu0 0.0
    %1332 = vmatprep.subr.mxu0 0.0
    %1333 = vmatpush1.msra.mxu0 0.0
    %1334 = vmatprep.subr.mxu0 0.0
    %1335 = vmatpush1.msra.mxu0 0.0
    %1336 = vmatprep.subr.mxu0 0.0
    %1337 = vmatpush1.msra.mxu0 0.0
    %1338 = vmatprep.subr.mxu0 0.0
    %1339 = vmatpush1.msra.mxu0 0.0
    %1340 = vmatprep.subr.mxu0 0.0
    %1341 = vmatpush1.msra.mxu0 0.0
    %1342 = vmatprep.subr.mxu0 0.0
    %1343 = vmatpush1.msra.mxu0 0.0
    %1344 = vmatprep.mubr.f32.mxu0 0.0
    %1345 = vmatmul.mubr.f32.gmra.mrb[0].mxu0 %v1278
    %v1346 = vpop.f32.mrb[0].mxu0
    %v1347 = vadd.f32 %v1275, %v1346
    %v1348 = vpop.f32.mrb[0].mxu0
    %v1349 = vadd.f32 %v1275, %v1348
    %1350 = vdwg.mxu0
    %1351 = vmatprep.subr.mxu0 0.0
    %1352 = vmatpush1.msra.mxu0 %v1269
    %1353 = vmatprep.subr.mxu0 0.0
    %1354 = vmatpush1.msra.mxu0 0.0
    %1355 = vmatprep.subr.mxu0 0.0
    %1356 = vmatpush1.msra.mxu0 0.0
    %1357 = vmatprep.subr.mxu0 0.0
    %1358 = vmatpush1.msra.mxu0 0.0
    %1359 = vmatprep.subr.mxu0 0.0
    %1360 = vmatpush1.msra.mxu0 0.0
    %1361 = vmatprep.subr.mxu0 0.0
    %1362 = vmatpush1.msra.mxu0 0.0
    %1363 = vmatprep.subr.mxu0 0.0
    %1364 = vmatpush1.msra.mxu0 0.0
    %1365 = vmatprep.subr.mxu0 0.0
    %1366 = vmatpush1.msra.mxu0 0.0
    %1367 = vmatprep.subr.mxu0 0.0
    %1368 = vmatpush1.msra.mxu0 0.0
    %1369 = vmatprep.subr.mxu0 0.0
    %1370 = vmatpush1.msra.mxu0 0.0
    %1371 = vmatprep.subr.mxu0 0.0
    %1372 = vmatpush1.msra.mxu0 0.0
    %1373 = vmatprep.subr.mxu0 0.0
    %1374 = vmatpush1.msra.mxu0 0.0
    %1375 = vmatprep.subr.mxu0 0.0
    %1376 = vmatpush1.msra.mxu0 0.0
    %1377 = vmatprep.subr.mxu0 0.0
    %1378 = vmatpush1.msra.mxu0 0.0
    %1379 = vmatprep.subr.mxu0 0.0
    %1380 = vmatpush1.msra.mxu0 0.0
    %1381 = vmatprep.subr.mxu0 0.0
    %1382 = vmatpush1.msra.mxu0 0.0
    %1383 = vmatprep.subr.mxu0 0.0
    %1384 = vmatpush1.msra.mxu0 0.0
    %1385 = vmatprep.subr.mxu0 0.0
    %1386 = vmatpush1.msra.mxu0 0.0
    %1387 = vmatprep.subr.mxu0 0.0
    %1388 = vmatpush1.msra.mxu0 0.0
    %1389 = vmatprep.subr.mxu0 0.0
    %1390 = vmatpush1.msra.mxu0 0.0
    %1391 = vmatprep.subr.mxu0 0.0
    %1392 = vmatpush1.msra.mxu0 0.0
    %1393 = vmatprep.subr.mxu0 0.0
    %1394 = vmatpush1.msra.mxu0 0.0
    %1395 = vmatprep.subr.mxu0 0.0
    %1396 = vmatpush1.msra.mxu0 0.0
    %1397 = vmatprep.subr.mxu0 0.0
    %1398 = vmatpush1.msra.mxu0 0.0
    %1399 = vmatprep.subr.mxu0 0.0
    %1400 = vmatpush1.msra.mxu0 0.0
    %1401 = vmatprep.subr.mxu0 0.0
    %1402 = vmatpush1.msra.mxu0 0.0
    %1403 = vmatprep.subr.mxu0 0.0
    %1404 = vmatpush1.msra.mxu0 0.0
    %1405 = vmatprep.subr.mxu0 0.0
    %1406 = vmatpush1.msra.mxu0 0.0
    %1407 = vmatprep.subr.mxu0 0.0
    %1408 = vmatpush1.msra.mxu0 0.0
    %1409 = vmatprep.subr.mxu0 0.0
    %1410 = vmatpush1.msra.mxu0 0.0
    %1411 = vmatprep.subr.mxu0 0.0
    %1412 = vmatpush1.msra.mxu0 0.0
    %1413 = vmatprep.subr.mxu0 0.0
    %1414 = vmatpush1.msra.mxu0 0.0
    %1415 = vmatprep.mubr.f32.mxu0 0.0
    %1416 = vmatmul.mubr.f32.gmra.mrb[0].mxu0 %v1278
    %v1417 = vpop.f32.mrb[0].mxu0
    %v1418 = vadd.f32 %v1275, %v1417
    %v1419 = vpop.f32.mrb[0].mxu0
    %1420 = vdwg.mxu0
    %vm1421 = vcmp.ge.f32.partialorder %v1347, 0.0
    %vm1422 = vcmp.ge.f32.partialorder %v1349, 0.0
    %vm1423 = vcmp.ge.f32.partialorder %v1418, 0.0
    %v1424 = vmul.f32 %v1347, 0.01
    %v1425 = vmul.f32 %v1349, 0.01
    %v1426 = vmul.f32 %v1418, 0.01
    %v1427 = vsel %vm1421, %v1347, %v1424
    %v1428 = vsel %vm1422, %v1349, %v1425
    %v1429 = vsel %vm1423, %v1418, %v1426
    %v1430 = vmul.f32 %v1427, %v288
    %v1431 = vmul.f32 %v1428, %v292
    %v1432 = vmul.f32 %v1429, %v296
    %1433 = vrot.lane.b32.xlu0 %v1430, 17
    %v1434 = vpop.permute.xlu0 %1433
    %1435 = vrot.lane.b32.xlu0 %v1431, 17
    %v1436 = vpop.permute.xlu0 %1435
    %1437 = vrot.lane.b32.xlu0 %v1432, 17
    %v1438 = vpop.permute.xlu0 %1437
    %v1439 = vsel %vm466, %v1436, %v1438
    %v1440 = vsel %vm466, %v1434, %v1436
    %v1441 = vsel %vm466, %v1438, %v1434
    %1442 = vrot.lane.b32.xlu0 %v1430, 16
    %v1443 = vpop.permute.xlu0 %1442
    %1444 = vrot.lane.b32.xlu0 %v1431, 16
    %v1445 = vpop.permute.xlu0 %1444
    %1446 = vrot.lane.b32.xlu0 %v1432, 16
    %v1447 = vpop.permute.xlu0 %1446
    %v1448 = vsel %vm476, %v1445, %v1447
    %v1449 = vsel %vm476, %v1443, %v1445
    %v1450 = vsel %vm476, %v1447, %v1443
    %1451 = vrot.lane.b32.xlu0 %v1430, 15
    %v1452 = vpop.permute.xlu0 %1451
    %1453 = vrot.lane.b32.xlu0 %v1431, 15
    %v1454 = vpop.permute.xlu0 %1453
    %1455 = vrot.lane.b32.xlu0 %v1432, 15
    %v1456 = vpop.permute.xlu0 %1455
    %v1457 = vsel %vm486, %v1454, %v1456
    %v1458 = vsel %vm486, %v1452, %v1454
    %v1459 = vsel %vm486, %v1456, %v1452
    %1460 = vrot.lane.b32.xlu0 %v1430, 1
    %v1461 = vpop.permute.xlu0 %1460
    %1462 = vrot.lane.b32.xlu0 %v1431, 1
    %v1463 = vpop.permute.xlu0 %1462
    %1464 = vrot.lane.b32.xlu0 %v1432, 1
    %v1465 = vpop.permute.xlu0 %1464
    %v1466 = vsel %vm496, %v1463, %v1465
    %v1467 = vsel %vm496, %v1461, %v1463
    %v1468 = vsel %vm496, %v1465, %v1461
    %1469 = vrot.lane.b32.xlu0 %v1430, 127
    %v1470 = vpop.permute.xlu0 %1469
    %1471 = vrot.lane.b32.xlu0 %v1431, 127
    %v1472 = vpop.permute.xlu0 %1471
    %1473 = vrot.lane.b32.xlu0 %v1432, 127
    %v1474 = vpop.permute.xlu0 %1473
    %v1475 = vsel %vm506, %v1472, %v1474
    %v1476 = vsel %vm506, %v1470, %v1472
    %v1477 = vsel %vm506, %v1474, %v1470
    %1478 = vrot.lane.b32.xlu0 %v1430, 113
    %v1479 = vpop.permute.xlu0 %1478
    %1480 = vrot.lane.b32.xlu0 %v1431, 113
    %v1481 = vpop.permute.xlu0 %1480
    %1482 = vrot.lane.b32.xlu0 %v1432, 113
    %v1483 = vpop.permute.xlu0 %1482
    %v1484 = vsel %vm516, %v1481, %v1483
    %v1485 = vsel %vm516, %v1479, %v1481
    %v1486 = vsel %vm516, %v1483, %v1479
    %1487 = vrot.lane.b32.xlu0 %v1430, 112
    %v1488 = vpop.permute.xlu0 %1487
    %1489 = vrot.lane.b32.xlu0 %v1431, 112
    %v1490 = vpop.permute.xlu0 %1489
    %1491 = vrot.lane.b32.xlu0 %v1432, 112
    %v1492 = vpop.permute.xlu0 %1491
    %v1493 = vsel %vm526, %v1490, %v1492
    %v1494 = vsel %vm526, %v1488, %v1490
    %v1495 = vsel %vm526, %v1492, %v1488
    %1496 = vrot.lane.b32.xlu0 %v1430, 111
    %v1497 = vpop.permute.xlu0 %1496
    %1498 = vrot.lane.b32.xlu0 %v1431, 111
    %v1499 = vpop.permute.xlu0 %1498
    %1500 = vrot.lane.b32.xlu0 %v1432, 111
    %v1501 = vpop.permute.xlu0 %1500
    %v1502 = vsel %vm536, %v1499, %v1501
    %v1503 = vsel %vm536, %v1497, %v1499
    %v1504 = vsel %vm536, %v1501, %v1497
    %v1505 = vld [vmem:[%s17] sm:$0xff]
    %v1506 = vld [vmem:[%s18] sm:$0xff]
    %1508 = vset.pattern.permute.xlu0 0
    %1509 = vperm.xlu0 %1508, %v1506
    %v1510 = vpop.permute.xlu0 %1509
    %v1513 = vsel %vm130, %v1505, 0
    %1515 = vmatprep.subr.mxu0 %v1440
    %1516 = vmatpush1.msra.mxu0 %v1441
    %1517 = vmatprep.subr.mxu0 %v1449
    %1518 = vmatpush1.msra.mxu0 %v1450
    %1519 = vmatprep.subr.mxu0 %v1458
    %1520 = vmatpush1.msra.mxu0 %v1459
    %1521 = vmatprep.subr.mxu0 %v1467
    %1522 = vmatpush1.msra.mxu0 %v1468
    %1523 = vmatprep.subr.mxu0 %v1431
    %1524 = vmatpush1.msra.mxu0 %v1430
    %1525 = vmatprep.subr.mxu0 %v1475
    %1526 = vmatpush1.msra.mxu0 %v1476
    %1527 = vmatprep.subr.mxu0 %v1484
    %1528 = vmatpush1.msra.mxu0 %v1485
    %1529 = vmatprep.subr.mxu0 %v1493
    %1530 = vmatpush1.msra.mxu0 %v1494
    %1531 = vmatprep.subr.mxu0 %v1502
    %1532 = vmatpush1.msra.mxu0 %v1503
    %1533 = vmatprep.subr.mxu0 0.0
    %1534 = vmatpush1.msra.mxu0 0.0
    %1535 = vmatprep.subr.mxu0 0.0
    %1536 = vmatpush1.msra.mxu0 0.0
    %1537 = vmatprep.subr.mxu0 0.0
    %1538 = vmatpush1.msra.mxu0 0.0
    %1539 = vmatprep.subr.mxu0 0.0
    %1540 = vmatpush1.msra.mxu0 0.0
    %1541 = vmatprep.subr.mxu0 0.0
    %1542 = vmatpush1.msra.mxu0 0.0
    %1543 = vmatprep.subr.mxu0 0.0
    %1544 = vmatpush1.msra.mxu0 0.0
    %1545 = vmatprep.subr.mxu0 0.0
    %1546 = vmatpush1.msra.mxu0 0.0
    %1547 = vmatprep.subr.mxu0 0.0
    %1548 = vmatpush1.msra.mxu0 0.0
    %1549 = vmatprep.subr.mxu0 0.0
    %1550 = vmatpush1.msra.mxu0 0.0
    %1551 = vmatprep.subr.mxu0 0.0
    %1552 = vmatpush1.msra.mxu0 0.0
    %1553 = vmatprep.subr.mxu0 0.0
    %1554 = vmatpush1.msra.mxu0 0.0
    %1555 = vmatprep.subr.mxu0 0.0
    %1556 = vmatpush1.msra.mxu0 0.0
    %1557 = vmatprep.subr.mxu0 0.0
    %1558 = vmatpush1.msra.mxu0 0.0
    %1559 = vmatprep.subr.mxu0 0.0
    %1560 = vmatpush1.msra.mxu0 0.0
    %1561 = vmatprep.subr.mxu0 0.0
    %1562 = vmatpush1.msra.mxu0 0.0
    %1563 = vmatprep.subr.mxu0 0.0
    %1564 = vmatpush1.msra.mxu0 0.0
    %1565 = vmatprep.subr.mxu0 0.0
    %1566 = vmatpush1.msra.mxu0 0.0
    %1567 = vmatprep.subr.mxu0 0.0
    %1568 = vmatpush1.msra.mxu0 0.0
    %1569 = vmatprep.subr.mxu0 0.0
    %1570 = vmatpush1.msra.mxu0 0.0
    %1571 = vmatprep.subr.mxu0 0.0
    %1572 = vmatpush1.msra.mxu0 0.0
    %1573 = vmatprep.subr.mxu0 0.0
    %1574 = vmatpush1.msra.mxu0 0.0
    %1575 = vmatprep.subr.mxu0 0.0
    %1576 = vmatpush1.msra.mxu0 0.0
    %1577 = vmatprep.subr.mxu0 0.0
    %1578 = vmatpush1.msra.mxu0 0.0
    %1579 = vmatprep.mubr.f32.mxu0 0.0
    %1580 = vmatmul.mubr.f32.gmra.mrb[0].mxu0 %v1513
    %v1581 = vpop.f32.mrb[0].mxu0
    %v1582 = vadd.f32 %v1510, %v1581
    %v1583 = vpop.f32.mrb[0].mxu0
    %v1584 = vadd.f32 %v1510, %v1583
    %1585 = vdwg.mxu0
    %1586 = vmatprep.subr.mxu0 0.0
    %1587 = vmatpush1.msra.mxu0 %v1439
    %1588 = vmatprep.subr.mxu0 0.0
    %1589 = vmatpush1.msra.mxu0 %v1448
    %1590 = vmatprep.subr.mxu0 0.0
    %1591 = vmatpush1.msra.mxu0 %v1457
    %1592 = vmatprep.subr.mxu0 0.0
    %1593 = vmatpush1.msra.mxu0 %v1466
    %1594 = vmatprep.subr.mxu0 0.0
    %1595 = vmatpush1.msra.mxu0 %v1432
    %1596 = vmatprep.subr.mxu0 0.0
    %1597 = vmatpush1.msra.mxu0 %v1477
    %1598 = vmatprep.subr.mxu0 0.0
    %1599 = vmatpush1.msra.mxu0 %v1486
    %1600 = vmatprep.subr.mxu0 0.0
    %1601 = vmatpush1.msra.mxu0 %v1495
    %1602 = vmatprep.subr.mxu0 0.0
    %1603 = vmatpush1.msra.mxu0 %v1504
    %1604 = vmatprep.subr.mxu0 0.0
    %1605 = vmatpush1.msra.mxu0 0.0
    %1606 = vmatprep.subr.mxu0 0.0
    %1607 = vmatpush1.msra.mxu0 0.0
    %1608 = vmatprep.subr.mxu0 0.0
    %1609 = vmatpush1.msra.mxu0 0.0
    %1610 = vmatprep.subr.mxu0 0.0
    %1611 = vmatpush1.msra.mxu0 0.0
    %1612 = vmatprep.subr.mxu0 0.0
    %1613 = vmatpush1.msra.mxu0 0.0
    %1614 = vmatprep.subr.mxu0 0.0
    %1615 = vmatpush1.msra.mxu0 0.0
    %1616 = vmatprep.subr.mxu0 0.0
    %1617 = vmatpush1.msra.mxu0 0.0
    %1618 = vmatprep.subr.mxu0 0.0
    %1619 = vmatpush1.msra.mxu0 0.0
    %1620 = vmatprep.subr.mxu0 0.0
    %1621 = vmatpush1.msra.mxu0 0.0
    %1622 = vmatprep.subr.mxu0 0.0
    %1623 = vmatpush1.msra.mxu0 0.0
    %1624 = vmatprep.subr.mxu0 0.0
    %1625 = vmatpush1.msra.mxu0 0.0
    %1626 = vmatprep.subr.mxu0 0.0
    %1627 = vmatpush1.msra.mxu0 0.0
    %1628 = vmatprep.subr.mxu0 0.0
    %1629 = vmatpush1.msra.mxu0 0.0
    %1630 = vmatprep.subr.mxu0 0.0
    %1631 = vmatpush1.msra.mxu0 0.0
    %1632 = vmatprep.subr.mxu0 0.0
    %1633 = vmatpush1.msra.mxu0 0.0
    %1634 = vmatprep.subr.mxu0 0.0
    %1635 = vmatpush1.msra.mxu0 0.0
    %1636 = vmatprep.subr.mxu0 0.0
    %1637 = vmatpush1.msra.mxu0 0.0
    %1638 = vmatprep.subr.mxu0 0.0
    %1639 = vmatpush1.msra.mxu0 0.0
    %1640 = vmatprep.subr.mxu0 0.0
    %1641 = vmatpush1.msra.mxu0 0.0
    %1642 = vmatprep.subr.mxu0 0.0
    %1643 = vmatpush1.msra.mxu0 0.0
    %1644 = vmatprep.subr.mxu0 0.0
    %1645 = vmatpush1.msra.mxu0 0.0
    %1646 = vmatprep.subr.mxu0 0.0
    %1647 = vmatpush1.msra.mxu0 0.0
    %1648 = vmatprep.subr.mxu0 0.0
    %1649 = vmatpush1.msra.mxu0 0.0
    %1650 = vmatprep.mubr.f32.mxu0 0.0
    %1651 = vmatmul.mubr.f32.gmra.mrb[0].mxu0 %v1513
    %v1652 = vpop.f32.mrb[0].mxu0
    %v1653 = vadd.f32 %v1510, %v1652
    %v1654 = vpop.f32.mrb[0].mxu0
    %1655 = vdwg.mxu0
    %vm1656 = vcmp.ge.f32.partialorder %v1582, 0.0
    %vm1657 = vcmp.ge.f32.partialorder %v1584, 0.0
    %vm1658 = vcmp.ge.f32.partialorder %v1653, 0.0
    %v1659 = vmul.f32 %v1582, 0.01
    %v1660 = vmul.f32 %v1584, 0.01
    %v1661 = vmul.f32 %v1653, 0.01
    %v1662 = vsel %vm1656, %v1582, %v1659
    %v1663 = vsel %vm1657, %v1584, %v1660
    %v1664 = vsel %vm1658, %v1653, %v1661
    %v1665 = vmul.f32 %v1662, %v288
    %v1666 = vmul.f32 %v1663, %v292
    %v1667 = vmul.f32 %v1664, %v296
    %v1668 = vld [vmem:[%s19] sm:$0xff]
    %v1669 = vld [vmem:[%s20] sm:$0xff]
    %1671 = vset.pattern.permute.xlu0 0
    %1672 = vperm.xlu0 %1671, %v1669
    %v1673 = vpop.permute.xlu0 %1672
    %v1676 = vsel %vm313, %v1668, 0
    %1678 = vmatprep.subr.mxu0 %v1666
    %1679 = vmatpush1.msra.mxu0 %v1665
    %1680 = vmatprep.subr.mxu0 0.0
    %1681 = vmatpush1.msra.mxu0 0.0
    %1682 = vmatprep.subr.mxu0 0.0
    %1683 = vmatpush1.msra.mxu0 0.0
    %1684 = vmatprep.subr.mxu0 0.0
    %1685 = vmatpush1.msra.mxu0 0.0
    %1686 = vmatprep.subr.mxu0 0.0
    %1687 = vmatpush1.msra.mxu0 0.0
    %1688 = vmatprep.subr.mxu0 0.0
    %1689 = vmatpush1.msra.mxu0 0.0
    %1690 = vmatprep.subr.mxu0 0.0
    %1691 = vmatpush1.msra.mxu0 0.0
    %1692 = vmatprep.subr.mxu0 0.0
    %1693 = vmatpush1.msra.mxu0 0.0
    %1694 = vmatprep.subr.mxu0 0.0
    %1695 = vmatpush1.msra.mxu0 0.0
    %1696 = vmatprep.subr.mxu0 0.0
    %1697 = vmatpush1.msra.mxu0 0.0
    %1698 = vmatprep.subr.mxu0 0.0
    %1699 = vmatpush1.msra.mxu0 0.0
    %1700 = vmatprep.subr.mxu0 0.0
    %1701 = vmatpush1.msra.mxu0 0.0
    %1702 = vmatprep.subr.mxu0 0.0
    %1703 = vmatpush1.msra.mxu0 0.0
    %1704 = vmatprep.subr.mxu0 0.0
    %1705 = vmatpush1.msra.mxu0 0.0
    %1706 = vmatprep.subr.mxu0 0.0
    %1707 = vmatpush1.msra.mxu0 0.0
    %1708 = vmatprep.subr.mxu0 0.0
    %1709 = vmatpush1.msra.mxu0 0.0
    %1710 = vmatprep.subr.mxu0 0.0
    %1711 = vmatpush1.msra.mxu0 0.0
    %1712 = vmatprep.subr.mxu0 0.0
    %1713 = vmatpush1.msra.mxu0 0.0
    %1714 = vmatprep.subr.mxu0 0.0
    %1715 = vmatpush1.msra.mxu0 0.0
    %1716 = vmatprep.subr.mxu0 0.0
    %1717 = vmatpush1.msra.mxu0 0.0
    %1718 = vmatprep.subr.mxu0 0.0
    %1719 = vmatpush1.msra.mxu0 0.0
    %1720 = vmatprep.subr.mxu0 0.0
    %1721 = vmatpush1.msra.mxu0 0.0
    %1722 = vmatprep.subr.mxu0 0.0
    %1723 = vmatpush1.msra.mxu0 0.0
    %1724 = vmatprep.subr.mxu0 0.0
    %1725 = vmatpush1.msra.mxu0 0.0
    %1726 = vmatprep.subr.mxu0 0.0
    %1727 = vmatpush1.msra.mxu0 0.0
    %1728 = vmatprep.subr.mxu0 0.0
    %1729 = vmatpush1.msra.mxu0 0.0
    %1730 = vmatprep.subr.mxu0 0.0
    %1731 = vmatpush1.msra.mxu0 0.0
    %1732 = vmatprep.subr.mxu0 0.0
    %1733 = vmatpush1.msra.mxu0 0.0
    %1734 = vmatprep.subr.mxu0 0.0
    %1735 = vmatpush1.msra.mxu0 0.0
    %1736 = vmatprep.subr.mxu0 0.0
    %1737 = vmatpush1.msra.mxu0 0.0
    %1738 = vmatprep.subr.mxu0 0.0
    %1739 = vmatpush1.msra.mxu0 0.0
    %1740 = vmatprep.subr.mxu0 0.0
    %1741 = vmatpush1.msra.mxu0 0.0
    %1742 = vmatprep.mubr.f32.mxu0 0.0
    %1743 = vmatmul.mubr.f32.gmra.mrb[0].mxu0 %v1676
    %v1744 = vpop.f32.mrb[0].mxu0
    %v1745 = vadd.f32 %v1673, %v1744
    %v1746 = vpop.f32.mrb[0].mxu0
    %v1747 = vadd.f32 %v1673, %v1746
    %1748 = vdwg.mxu0
    %1749 = vmatprep.subr.mxu0 0.0
    %1750 = vmatpush1.msra.mxu0 %v1667
    %1751 = vmatprep.subr.mxu0 0.0
    %1752 = vmatpush1.msra.mxu0 0.0
    %1753 = vmatprep.subr.mxu0 0.0
    %1754 = vmatpush1.msra.mxu0 0.0
    %1755 = vmatprep.subr.mxu0 0.0
    %1756 = vmatpush1.msra.mxu0 0.0
    %1757 = vmatprep.subr.mxu0 0.0
    %1758 = vmatpush1.msra.mxu0 0.0
    %1759 = vmatprep.subr.mxu0 0.0
    %1760 = vmatpush1.msra.mxu0 0.0
    %1761 = vmatprep.subr.mxu0 0.0
    %1762 = vmatpush1.msra.mxu0 0.0
    %1763 = vmatprep.subr.mxu0 0.0
    %1764 = vmatpush1.msra.mxu0 0.0
    %1765 = vmatprep.subr.mxu0 0.0
    %1766 = vmatpush1.msra.mxu0 0.0
    %1767 = vmatprep.subr.mxu0 0.0
    %1768 = vmatpush1.msra.mxu0 0.0
    %1769 = vmatprep.subr.mxu0 0.0
    %1770 = vmatpush1.msra.mxu0 0.0
    %1771 = vmatprep.subr.mxu0 0.0
    %1772 = vmatpush1.msra.mxu0 0.0
    %1773 = vmatprep.subr.mxu0 0.0
    %1774 = vmatpush1.msra.mxu0 0.0
    %1775 = vmatprep.subr.mxu0 0.0
    %1776 = vmatpush1.msra.mxu0 0.0
    %1777 = vmatprep.subr.mxu0 0.0
    %1778 = vmatpush1.msra.mxu0 0.0
    %1779 = vmatprep.subr.mxu0 0.0
    %1780 = vmatpush1.msra.mxu0 0.0
    %1781 = vmatprep.subr.mxu0 0.0
    %1782 = vmatpush1.msra.mxu0 0.0
    %1783 = vmatprep.subr.mxu0 0.0
    %1784 = vmatpush1.msra.mxu0 0.0
    %1785 = vmatprep.subr.mxu0 0.0
    %1786 = vmatpush1.msra.mxu0 0.0
    %1787 = vmatprep.subr.mxu0 0.0
    %1788 = vmatpush1.msra.mxu0 0.0
    %1789 = vmatprep.subr.mxu0 0.0
    %1790 = vmatpush1.msra.mxu0 0.0
    %1791 = vmatprep.subr.mxu0 0.0
    %1792 = vmatpush1.msra.mxu0 0.0
    %1793 = vmatprep.subr.mxu0 0.0
    %1794 = vmatpush1.msra.mxu0 0.0
    %1795 = vmatprep.subr.mxu0 0.0
    %1796 = vmatpush1.msra.mxu0 0.0
    %1797 = vmatprep.subr.mxu0 0.0
    %1798 = vmatpush1.msra.mxu0 0.0
    %1799 = vmatprep.subr.mxu0 0.0
    %1800 = vmatpush1.msra.mxu0 0.0
    %1801 = vmatprep.subr.mxu0 0.0
    %1802 = vmatpush1.msra.mxu0 0.0
    %1803 = vmatprep.subr.mxu0 0.0
    %1804 = vmatpush1.msra.mxu0 0.0
    %1805 = vmatprep.subr.mxu0 0.0
    %1806 = vmatpush1.msra.mxu0 0.0
    %1807 = vmatprep.subr.mxu0 0.0
    %1808 = vmatpush1.msra.mxu0 0.0
    %1809 = vmatprep.subr.mxu0 0.0
    %1810 = vmatpush1.msra.mxu0 0.0
    %1811 = vmatprep.subr.mxu0 0.0
    %1812 = vmatpush1.msra.mxu0 0.0
    %1813 = vmatprep.mubr.f32.mxu0 0.0
    %1814 = vmatmul.mubr.f32.gmra.mrb[0].mxu0 %v1676
    %v1815 = vpop.f32.mrb[0].mxu0
    %v1816 = vadd.f32 %v1673, %v1815
    %v1817 = vpop.f32.mrb[0].mxu0
    %1818 = vdwg.mxu0
    %v1819 = vadd.f32 %v1745, %v1267
    %v1820 = vadd.f32 %v1747, %v1268
    %v1821 = vadd.f32 %v1816, %v1269
    %vm1822 = vcmp.ge.f32.partialorder %v1819, 0.0
    %vm1823 = vcmp.ge.f32.partialorder %v1820, 0.0
    %vm1824 = vcmp.ge.f32.partialorder %v1821, 0.0
    %v1825 = vmul.f32 %v1819, 0.01
    %v1826 = vmul.f32 %v1820, 0.01
    %v1827 = vmul.f32 %v1821, 0.01
    %v1828 = vsel %vm1822, %v1819, %v1825
    %v1829 = vsel %vm1823, %v1820, %v1826
    %v1830 = vsel %vm1824, %v1821, %v1827
    %v1831 = vmul.f32 %v1828, %v288
    %v1832 = vmul.f32 %v1829, %v292
    %v1833 = vmul.f32 %v1830, %v296
    %1834 = vst [vmem:[#allocation7] sm:$0xff] %v1831
    %1835 = vst [vmem:[#allocation7 + $0x8] sm:$0xff] %v1832
    %1836 = vst [vmem:[#allocation7 + $0x10] sm:$0xff] %v1833
    // Predicated region
    $region94: #{tpu_custom_call.1} parent=1 // pred_check
      _
    $region95: #{tpu_custom_call.1} parent=1 // pred_check_branch
      %1838 = sbr.rel (0) target = $region97
    $region96: #{tpu_custom_call.1} parent=1 // pred_region
      %s1840 = ssub.s32 384, 384
      %1841 = vsyncadd [#allocation4], %s1840
      %s1843 = sshll.u32 [#allocation7], 4
      %s1844 = int_to_ptr.vmem [resolvable:$true] %s1843
      %1846 = dma.vmem_to_hbm [thread:$0]  %s1844, 384, %s21, [#allocation4]
    $region97: #{tpu_custom_call.1} parent=1 // pred_fallthru
      _
    // Predicated region
    $region98: #{tpu_custom_call.1} parent=1 // pred_check
      _
    $region99: #{tpu_custom_call.1} parent=1 // pred_check_branch
      %1848 = sbr.rel (0) target = $region101
    $region100: #{tpu_custom_call.1} parent=1 // pred_region
      %1849 = dma.done [#allocation4], 384
    $region101: #{tpu_custom_call.1} parent=1 // pred_fallthru
      _
    %1850 = vsyncpa [#allocation3], 1
    %1851 = vsyncpa [#allocation6], 1
    %1852 = vsyncpa [#allocation4], 1

</llo_original>
